<compile_context>
chip_gen: v6e
topology: v6e:2x2x1
jax: 0.10.0
libtpu: 0.0.40
codegen_flags: <defaults>
</compile_context>

<pallas_src>
import math
import jax
import jax.numpy as jnp
from jax.experimental import pallas as pl
from jax.experimental.pallas import tpu as pltpu


NOUT = 128        # lane-dense fused output width
N_HEADS = 14      # policy heads live in output cols [0, 14)
HIDDEN_OFF = 14   # value_dense hidden cols live at [14, 78) in the fused pre-activation
N_OBS = 15        # 14 policy-head inputs + 1 value input


def _round_up(x, m):
    return ((x + m - 1) // m) * m


# --------------------------------------------------------------------------- #
# Kernel
# --------------------------------------------------------------------------- #
def _make_post_model_kernel(matmul_dtype):
    def kernel(*refs):
        obs_refs = refs[:N_OBS]
        w_refs = refs[N_OBS:2 * N_OBS]
        bf_ref, w2_ref, b2_ref, out_ref = refs[2 * N_OBS:]

        # Fused pre-activation: 15 per-segment partial dots accumulated in f32.
        acc = jnp.dot(obs_refs[0][...].astype(matmul_dtype), w_refs[0][...],
                      preferred_element_type=jnp.float32)
        for oref, wref in zip(obs_refs[1:], w_refs[1:]):
            acc = acc + jnp.dot(oref[...].astype(matmul_dtype), wref[...],
                                preferred_element_type=jnp.float32)
        h = jnp.maximum(acc + bf_ref[...], 0.0)                 # [TB, 128] f32

        # Policy logits (cols < 14) kept, hidden cols zeroed by the iota mask;
        # value heads come from the hidden cols (14..77) via the padded W2.
        col = jax.lax.broadcasted_iota(jnp.int32, h.shape, 1)
        head_part = jnp.where(col < N_HEADS, h, 0.0)
        val_part = jnp.dot(h.astype(matmul_dtype), w2_ref[...],
                           preferred_element_type=jnp.float32)
        out_ref[...] = head_part + val_part + b2_ref[...]
    return kernel


# --------------------------------------------------------------------------- #
# Parameter init (mirrors nn.Linear shapes) and one-time packing
# --------------------------------------------------------------------------- #
def _uniform(key, shape, fan_in):
    bound = 1.0 / math.sqrt(fan_in)
    return jax.random.uniform(key, shape, jnp.float32, -bound, bound)


def init_params(key, move_dim, dmax_dim, res_dim, val_dim, is_dda):
    params = {}
    names_dims = (
        [(f"out_move{i}", move_dim) for i in range(1, 5)]
        + [(f"out_dmaxmove{i}", dmax_dim) for i in range(1, 5)]
        + [(f"out_reserved_poke{i}", res_dim) for i in range(1, 7)]
    )
    for name, d in names_dims:
        key, kw, kb = jax.random.split(key, 3)
        params[name] = (_uniform(kw, (d,), d), _uniform(kb, (), d))  # w:[d], b:scalar
    key, kw, kb = jax.random.split(key, 3)
    params["value_dense"] = (_uniform(kw, (val_dim, 64), val_dim),
                             _uniform(kb, (64,), val_dim))
    for name in ["value_logit", "int_value_head"] + (["dda_rnd_head"] if is_dda else []):
        key, kw, kb = jax.random.split(key, 3)
        params[name] = (_uniform(kw, (64,), 64), _uniform(kb, (), 64))
    return params


def pack_params(params, move_dim, dmax_dim, res_dim, val_dim, is_dda,
                matmul_dtype=jnp.bfloat16):
    """One-time packing: per-segment weight blocks [d_i, 128] + value-head W2."""
    head_dims = [move_dim] * 4 + [dmax_dim] * 4 + [res_dim] * 6
    # Intentional reuse of out_dmaxmove1 for obs[5..7] (PyTorch quirk).
    head_names = ([f"out_move{i}" for i in range(1, 5)]
                  + ["out_dmaxmove1"] * 4
                  + [f"out_reserved_poke{i}" for i in range(1, 7)])

    w_blocks = []
    b_fused = jnp.zeros((1, NOUT), jnp.float32)
    for h, (name, d) in enumerate(zip(head_names, head_dims)):
        wv, bv = params[name]
        wb = jnp.zeros((d, NOUT), jnp.float32).at[:, h].set(wv)
        w_blocks.append(wb.astype(matmul_dtype))
        b_fused = b_fused.at[0, h].set(bv)

    w1, b1 = params["value_dense"]
    wb = jnp.zeros((val_dim, NOUT), jnp.float32)
    wb = wb.at[:, HIDDEN_OFF:HIDDEN_OFF + 64].set(w1)
    w_blocks.append(wb.astype(matmul_dtype))
    b_fused = b_fused.at[0, HIDDEN_OFF:HIDDEN_OFF + 64].set(b1)

    val_names = ["value_logit", "int_value_head"] + (["dda_rnd_head"] if is_dda else [])
    w2 = jnp.zeros((NOUT, NOUT), jnp.float32)
    b2 = jnp.zeros((1, NOUT), jnp.float32)
    for j, name in enumerate(val_names):
        wv, bv = params[name]
        w2 = w2.at[HIDDEN_OFF:HIDDEN_OFF + 64, HIDDEN_OFF + j].set(wv)
        b2 = b2.at[0, HIDDEN_OFF + j].set(bv)

    return dict(w_blocks=tuple(w_blocks), b_fused=b_fused,
                w2=w2.astype(matmul_dtype), b2=b2,
                head_dims=tuple(head_dims), val_dim=val_dim, is_dda=is_dda,
                matmul_dtype=matmul_dtype)


# --------------------------------------------------------------------------- #
# Batch tiling: minimal padding, grid >= 2 (v7x 2-TC sharding) when B >= 16.
# --------------------------------------------------------------------------- #
def _batch_tiling(B, tb_max):
    if B < 16:
        return B, 1                       # single full-dim block
    min_grid = 4 if B >= 64 else 2
    grid = max(pl.cdiv(B, tb_max), min_grid)
    tb = _round_up(pl.cdiv(B, grid), 8)
    tb = min(tb, _round_up(B, 8))
    grid = pl.cdiv(B, tb)                 # boundary block may be partial (masked)
    return tb, grid


# --------------------------------------------------------------------------- #
# Forward
# --------------------------------------------------------------------------- #
def base_post_model_forward(obs, action_masks, packed, *, tb_max=1024):
    B = obs[0].shape[0]
    dims = list(packed["head_dims"]) + [packed["val_dim"]]
    assert len(obs) == N_OBS
    for i, d in enumerate(dims):
        assert obs[i].shape == (B, d), f"obs[{i}]: expected {(B, d)}, got {obs[i].shape}"

    obs_f32 = [o.astype(jnp.float32) for o in obs]
    tb, grid = _batch_tiling(B, tb_max)

    obs_specs = [pl.BlockSpec((tb, d), lambda i: (i, 0)) for d in dims]
    w_specs = [pl.BlockSpec((d, NOUT), lambda i: (0, 0)) for d in dims]
    misc_specs = [
        pl.BlockSpec((1, NOUT), lambda i: (0, 0)),       # fused bias (f32)
        pl.BlockSpec((NOUT, NOUT), lambda i: (0, 0)),    # padded W2 (value heads)
        pl.BlockSpec((1, NOUT), lambda i: (0, 0)),       # padded b2 (f32)
    ]

    # VMEM budget: obs/out tiles are lane-padded to 128 in VMEM; double-buffered.
    wbytes = jnp.dtype(packed["matmul_dtype"]).itemsize
    tile_bytes = sum(tb * _round_up(d, 128) * 4 for d in dims) + tb * NOUT * 4
    weight_bytes = (sum(_round_up(d, 16) * NOUT * wbytes for d in dims)
                    + NOUT * 4 + NOUT * NOUT * wbytes + NOUT * 4)
    vmem_limit = int(2 * tile_bytes + 2 * weight_bytes + (8 << 20))
    vmem_limit = max(16 << 20, min(vmem_limit, 56 << 20))   # stay under v7x 64 MiB

    kernel = _make_post_model_kernel(packed["matmul_dtype"])

    out = pl.pallas_call(
        kernel,
        out_shape=jax.ShapeDtypeStruct((B, NOUT), jnp.float32),
        grid=(grid,),
        in_specs=obs_specs + w_specs + misc_specs,
        out_specs=pl.BlockSpec((tb, NOUT), lambda i: (i, 0)),
        compiler_params=pltpu.CompilerParams(
            dimension_semantics=("parallel",),
            vmem_limit_bytes=vmem_limit),
    )(*obs_f32, *packed["w_blocks"], packed["b_fused"], packed["w2"], packed["b2"])

    logits = out[:, :N_HEADS] * action_masks.astype(jnp.float32)
    value = out[:, HIDDEN_OFF:HIDDEN_OFF + 1]
    int_value = out[:, HIDDEN_OFF + 1:HIDDEN_OFF + 2]
    if packed["is_dda"]:
        dda_value = out[:, HIDDEN_OFF + 2:HIDDEN_OFF + 3]
        return logits, value, int_value, dda_value
    return logits, value, int_value


# --------------------------------------------------------------------------- #
# Pure-JAX reference (mirrors the PyTorch forward, incl. dmaxmove1 reuse)
# --------------------------------------------------------------------------- #
def _reference_forward(obs, action_masks, params, is_dda):
    head_params = (
        [params[f"out_move{i}"] for i in range(1, 5)]
        + [params["out_dmaxmove1"]] * 4
        + [params[f"out_reserved_poke{i}"] for i in range(1, 7)]
    )
    cols = [jax.nn.relu(obs[h] @ head_params[h][0] + head_params[h][1])[:, None]
            for h in range(14)]
    logits = jnp.concatenate(cols, axis=-1) * action_masks
    w1, b1 = params["value_dense"]
    hid = jax.nn.relu(obs[14] @ w1 + b1)
    value = (hid @ params["value_logit"][0] + params["value_logit"][1])[:, None]
    int_value = (hid @ params["int_value_head"][0] + params["int_value_head"][1])[:, None]
    if is_dda:
        dda = (hid @ params["dda_rnd_head"][0] + params["dda_rnd_head"][1])[:, None]
        return logits, value, int_value, dda
    return logits, value, int_value


# --------------------------------------------------------------------------- #
if __name__ == "__main__":
    MOVE_DIM, DMAX_DIM, RES_DIM, VAL_DIM = 16, 12, 20, 32
    IS_DDA = True

    key = jax.random.PRNGKey(0)
    key, pkey = jax.random.split(key)
    params = init_params(pkey, MOVE_DIM, DMAX_DIM, RES_DIM, VAL_DIM, IS_DDA)
    packed_f32 = pack_params(params, MOVE_DIM, DMAX_DIM, RES_DIM, VAL_DIM, IS_DDA,
                             matmul_dtype=jnp.float32)
    packed_bf16 = pack_params(params, MOVE_DIM, DMAX_DIM, RES_DIM, VAL_DIM, IS_DDA,
                              matmul_dtype=jnp.bfloat16)

    dims = [MOVE_DIM] * 4 + [DMAX_DIM] * 4 + [RES_DIM] * 6 + [VAL_DIM]

    def make_inputs(key, B):
        obs = []
        for d in dims:
            key, k = jax.random.split(key)
            obs.append(jax.random.normal(k, (B, d), jnp.float32))
        key, k = jax.random.split(key)
        masks = (jax.random.uniform(k, (B, 14)) > 0.3).astype(jnp.float32)
        return key, obs, masks

    def check(outs, refs, atol, rtol):
        assert len(outs) == len(refs)
        for o, r in zip(outs, refs):
            assert o.shape == r.shape and o.dtype == jnp.float32
            assert jnp.allclose(o, r, atol=atol, rtol=rtol), \
                f"max abs err {jnp.max(jnp.abs(o - r))}"

    # Small batch: single full-dim block (grid = 1).
    key, obs, masks = make_inputs(key, 2)
    refs = _reference_forward(obs, masks, params, IS_DDA)
    outs = jax.block_until_ready(base_post_model_forward(obs, masks, packed_f32))
    check(outs, refs, atol=1e-4, rtol=1e-4)
    outs = jax.block_until_ready(base_post_model_forward(obs, masks, packed_bf16))
    check(outs, refs, atol=5e-2, rtol=5e-2)   # bf16 matmul operands, f32 accumulate

    # Non-multiple batch: multi-block parallel grid with a partial boundary block.
    key, obs, masks = make_inputs(key, 84)
    refs = _reference_forward(obs, masks, params, IS_DDA)
    outs = jax.block_until_ready(base_post_model_forward(obs, masks, packed_f32))
    check(outs, refs, atol=1e-4, rtol=1e-4)
    outs = jax.block_until_ready(base_post_model_forward(obs, masks, packed_bf16))
    check(outs, refs, atol=5e-2, rtol=5e-2)

    print("KERNEL_OK")
</pallas_src>

<mosaic_0001>
module attributes {stable_mosaic.version = 11 : i64} {
  func.func @kernel(%arg0: i32, %arg1: memref<2x16xf32, #tpu.memory_space<vmem>>, %arg2: memref<2x16xf32, #tpu.memory_space<vmem>>, %arg3: memref<2x16xf32, #tpu.memory_space<vmem>>, %arg4: memref<2x16xf32, #tpu.memory_space<vmem>>, %arg5: memref<2x12xf32, #tpu.memory_space<vmem>>, %arg6: memref<2x12xf32, #tpu.memory_space<vmem>>, %arg7: memref<2x12xf32, #tpu.memory_space<vmem>>, %arg8: memref<2x12xf32, #tpu.memory_space<vmem>>, %arg9: memref<2x20xf32, #tpu.memory_space<vmem>>, %arg10: memref<2x20xf32, #tpu.memory_space<vmem>>, %arg11: memref<2x20xf32, #tpu.memory_space<vmem>>, %arg12: memref<2x20xf32, #tpu.memory_space<vmem>>, %arg13: memref<2x20xf32, #tpu.memory_space<vmem>>, %arg14: memref<2x20xf32, #tpu.memory_space<vmem>>, %arg15: memref<2x32xf32, #tpu.memory_space<vmem>>, %arg16: memref<16x128xf32, #tpu.memory_space<vmem>>, %arg17: memref<16x128xf32, #tpu.memory_space<vmem>>, %arg18: memref<16x128xf32, #tpu.memory_space<vmem>>, %arg19: memref<16x128xf32, #tpu.memory_space<vmem>>, %arg20: memref<12x128xf32, #tpu.memory_space<vmem>>, %arg21: memref<12x128xf32, #tpu.memory_space<vmem>>, %arg22: memref<12x128xf32, #tpu.memory_space<vmem>>, %arg23: memref<12x128xf32, #tpu.memory_space<vmem>>, %arg24: memref<20x128xf32, #tpu.memory_space<vmem>>, %arg25: memref<20x128xf32, #tpu.memory_space<vmem>>, %arg26: memref<20x128xf32, #tpu.memory_space<vmem>>, %arg27: memref<20x128xf32, #tpu.memory_space<vmem>>, %arg28: memref<20x128xf32, #tpu.memory_space<vmem>>, %arg29: memref<20x128xf32, #tpu.memory_space<vmem>>, %arg30: memref<32x128xf32, #tpu.memory_space<vmem>>, %arg31: memref<1x128xf32, #tpu.memory_space<vmem>>, %arg32: memref<128x128xf32, #tpu.memory_space<vmem>>, %arg33: memref<1x128xf32, #tpu.memory_space<vmem>>, %arg34: memref<2x128xf32, #tpu.memory_space<vmem>>) attributes {dimension_semantics = [#tpu.dimension_semantics<parallel>], iteration_bounds = array<i64: 1>, scalar_prefetch = 0 : i64, scratch_operands = 0 : i64, tpu.core_type = #tpu.core_type<tc>, window_params = [{transform_indices = @transform_0, window_bounds = array<i64: 2, 16>}, {transform_indices = @transform_1, window_bounds = array<i64: 2, 16>}, {transform_indices = @transform_2, window_bounds = array<i64: 2, 16>}, {transform_indices = @transform_3, window_bounds = array<i64: 2, 16>}, {transform_indices = @transform_4, window_bounds = array<i64: 2, 12>}, {transform_indices = @transform_5, window_bounds = array<i64: 2, 12>}, {transform_indices = @transform_6, window_bounds = array<i64: 2, 12>}, {transform_indices = @transform_7, window_bounds = array<i64: 2, 12>}, {transform_indices = @transform_8, window_bounds = array<i64: 2, 20>}, {transform_indices = @transform_9, window_bounds = array<i64: 2, 20>}, {transform_indices = @transform_10, window_bounds = array<i64: 2, 20>}, {transform_indices = @transform_11, window_bounds = array<i64: 2, 20>}, {transform_indices = @transform_12, window_bounds = array<i64: 2, 20>}, {transform_indices = @transform_13, window_bounds = array<i64: 2, 20>}, {transform_indices = @transform_14, window_bounds = array<i64: 2, 32>}, {pipeline_mode = #tpu.pipeline_mode<synchronous>, transform_indices = @transform_15, window_bounds = array<i64: 16, 128>}, {pipeline_mode = #tpu.pipeline_mode<synchronous>, transform_indices = @transform_16, window_bounds = array<i64: 16, 128>}, {pipeline_mode = #tpu.pipeline_mode<synchronous>, transform_indices = @transform_17, window_bounds = array<i64: 16, 128>}, {pipeline_mode = #tpu.pipeline_mode<synchronous>, transform_indices = @transform_18, window_bounds = array<i64: 16, 128>}, {pipeline_mode = #tpu.pipeline_mode<synchronous>, transform_indices = @transform_19, window_bounds = array<i64: 12, 128>}, {pipeline_mode = #tpu.pipeline_mode<synchronous>, transform_indices = @transform_20, window_bounds = array<i64: 12, 128>}, {pipeline_mode = #tpu.pipeline_mode<synchronous>, transform_indices = @transform_21, window_bounds = array<i64: 12, 128>}, {pipeline_mode = #tpu.pipeline_mode<synchronous>, transform_indices = @transform_22, window_bounds = array<i64: 12, 128>}, {pipeline_mode = #tpu.pipeline_mode<synchronous>, transform_indices = @transform_23, window_bounds = array<i64: 20, 128>}, {pipeline_mode = #tpu.pipeline_mode<synchronous>, transform_indices = @transform_24, window_bounds = array<i64: 20, 128>}, {pipeline_mode = #tpu.pipeline_mode<synchronous>, transform_indices = @transform_25, window_bounds = array<i64: 20, 128>}, {pipeline_mode = #tpu.pipeline_mode<synchronous>, transform_indices = @transform_26, window_bounds = array<i64: 20, 128>}, {pipeline_mode = #tpu.pipeline_mode<synchronous>, transform_indices = @transform_27, window_bounds = array<i64: 20, 128>}, {pipeline_mode = #tpu.pipeline_mode<synchronous>, transform_indices = @transform_28, window_bounds = array<i64: 20, 128>}, {pipeline_mode = #tpu.pipeline_mode<synchronous>, transform_indices = @transform_29, window_bounds = array<i64: 32, 128>}, {pipeline_mode = #tpu.pipeline_mode<synchronous>, transform_indices = @transform_30, window_bounds = array<i64: 1, 128>}, {pipeline_mode = #tpu.pipeline_mode<synchronous>, transform_indices = @transform_31, window_bounds = array<i64: 128, 128>}, {pipeline_mode = #tpu.pipeline_mode<synchronous>, transform_indices = @transform_32, window_bounds = array<i64: 1, 128>}, {transform_indices = @transform_33, window_bounds = array<i64: 2, 128>}]} {
    %c0 = arith.constant 0 : index
    %c0_0 = arith.constant 0 : index
    %0 = vector.load %arg1[%c0, %c0_0] : memref<2x16xf32, #tpu.memory_space<vmem>>, vector<2x16xf32>
    %c0_1 = arith.constant 0 : index
    %c0_2 = arith.constant 0 : index
    %1 = vector.load %arg16[%c0_1, %c0_2] : memref<16x128xf32, #tpu.memory_space<vmem>>, vector<16x128xf32>
    %cst = arith.constant dense<0.000000e+00> : vector<2x128xf32>
    %2 = tpu.matmul %0, %1, %cst {dimension_numbers = #tpu.dot_dimension_numbers<[1], [0], [0], [1], [0, 0, 1, 1], [], []>} : vector<2x16xf32>, vector<16x128xf32>, vector<2x128xf32> -> vector<2x128xf32>
    %c0_3 = arith.constant 0 : index
    %c0_4 = arith.constant 0 : index
    %3 = vector.load %arg2[%c0_3, %c0_4] : memref<2x16xf32, #tpu.memory_space<vmem>>, vector<2x16xf32>
    %c0_5 = arith.constant 0 : index
    %c0_6 = arith.constant 0 : index
    %4 = vector.load %arg17[%c0_5, %c0_6] : memref<16x128xf32, #tpu.memory_space<vmem>>, vector<16x128xf32>
    %cst_7 = arith.constant dense<0.000000e+00> : vector<2x128xf32>
    %5 = tpu.matmul %3, %4, %cst_7 {dimension_numbers = #tpu.dot_dimension_numbers<[1], [0], [0], [1], [0, 0, 1, 1], [], []>} : vector<2x16xf32>, vector<16x128xf32>, vector<2x128xf32> -> vector<2x128xf32>
    %6 = arith.addf %2, %5 : vector<2x128xf32>
    %c0_8 = arith.constant 0 : index
    %c0_9 = arith.constant 0 : index
    %7 = vector.load %arg3[%c0_8, %c0_9] : memref<2x16xf32, #tpu.memory_space<vmem>>, vector<2x16xf32>
    %c0_10 = arith.constant 0 : index
    %c0_11 = arith.constant 0 : index
    %8 = vector.load %arg18[%c0_10, %c0_11] : memref<16x128xf32, #tpu.memory_space<vmem>>, vector<16x128xf32>
    %cst_12 = arith.constant dense<0.000000e+00> : vector<2x128xf32>
    %9 = tpu.matmul %7, %8, %cst_12 {dimension_numbers = #tpu.dot_dimension_numbers<[1], [0], [0], [1], [0, 0, 1, 1], [], []>} : vector<2x16xf32>, vector<16x128xf32>, vector<2x128xf32> -> vector<2x128xf32>
    %10 = arith.addf %6, %9 : vector<2x128xf32>
    %c0_13 = arith.constant 0 : index
    %c0_14 = arith.constant 0 : index
    %11 = vector.load %arg4[%c0_13, %c0_14] : memref<2x16xf32, #tpu.memory_space<vmem>>, vector<2x16xf32>
    %c0_15 = arith.constant 0 : index
    %c0_16 = arith.constant 0 : index
    %12 = vector.load %arg19[%c0_15, %c0_16] : memref<16x128xf32, #tpu.memory_space<vmem>>, vector<16x128xf32>
    %cst_17 = arith.constant dense<0.000000e+00> : vector<2x128xf32>
    %13 = tpu.matmul %11, %12, %cst_17 {dimension_numbers = #tpu.dot_dimension_numbers<[1], [0], [0], [1], [0, 0, 1, 1], [], []>} : vector<2x16xf32>, vector<16x128xf32>, vector<2x128xf32> -> vector<2x128xf32>
    %14 = arith.addf %10, %13 : vector<2x128xf32>
    %c0_18 = arith.constant 0 : index
    %c0_19 = arith.constant 0 : index
    %15 = vector.load %arg5[%c0_18, %c0_19] : memref<2x12xf32, #tpu.memory_space<vmem>>, vector<2x12xf32>
    %c0_20 = arith.constant 0 : index
    %c0_21 = arith.constant 0 : index
    %16 = vector.load %arg20[%c0_20, %c0_21] : memref<12x128xf32, #tpu.memory_space<vmem>>, vector<12x128xf32>
    %cst_22 = arith.constant dense<0.000000e+00> : vector<2x128xf32>
    %17 = tpu.matmul %15, %16, %cst_22 {dimension_numbers = #tpu.dot_dimension_numbers<[1], [0], [0], [1], [0, 0, 1, 1], [], []>} : vector<2x12xf32>, vector<12x128xf32>, vector<2x128xf32> -> vector<2x128xf32>
    %18 = arith.addf %14, %17 : vector<2x128xf32>
    %c0_23 = arith.constant 0 : index
    %c0_24 = arith.constant 0 : index
    %19 = vector.load %arg6[%c0_23, %c0_24] : memref<2x12xf32, #tpu.memory_space<vmem>>, vector<2x12xf32>
    %c0_25 = arith.constant 0 : index
    %c0_26 = arith.constant 0 : index
    %20 = vector.load %arg21[%c0_25, %c0_26] : memref<12x128xf32, #tpu.memory_space<vmem>>, vector<12x128xf32>
    %cst_27 = arith.constant dense<0.000000e+00> : vector<2x128xf32>
    %21 = tpu.matmul %19, %20, %cst_27 {dimension_numbers = #tpu.dot_dimension_numbers<[1], [0], [0], [1], [0, 0, 1, 1], [], []>} : vector<2x12xf32>, vector<12x128xf32>, vector<2x128xf32> -> vector<2x128xf32>
    %22 = arith.addf %18, %21 : vector<2x128xf32>
    %c0_28 = arith.constant 0 : index
    %c0_29 = arith.constant 0 : index
    %23 = vector.load %arg7[%c0_28, %c0_29] : memref<2x12xf32, #tpu.memory_space<vmem>>, vector<2x12xf32>
    %c0_30 = arith.constant 0 : index
    %c0_31 = arith.constant 0 : index
    %24 = vector.load %arg22[%c0_30, %c0_31] : memref<12x128xf32, #tpu.memory_space<vmem>>, vector<12x128xf32>
    %cst_32 = arith.constant dense<0.000000e+00> : vector<2x128xf32>
    %25 = tpu.matmul %23, %24, %cst_32 {dimension_numbers = #tpu.dot_dimension_numbers<[1], [0], [0], [1], [0, 0, 1, 1], [], []>} : vector<2x12xf32>, vector<12x128xf32>, vector<2x128xf32> -> vector<2x128xf32>
    %26 = arith.addf %22, %25 : vector<2x128xf32>
    %c0_33 = arith.constant 0 : index
    %c0_34 = arith.constant 0 : index
    %27 = vector.load %arg8[%c0_33, %c0_34] : memref<2x12xf32, #tpu.memory_space<vmem>>, vector<2x12xf32>
    %c0_35 = arith.constant 0 : index
    %c0_36 = arith.constant 0 : index
    %28 = vector.load %arg23[%c0_35, %c0_36] : memref<12x128xf32, #tpu.memory_space<vmem>>, vector<12x128xf32>
    %cst_37 = arith.constant dense<0.000000e+00> : vector<2x128xf32>
    %29 = tpu.matmul %27, %28, %cst_37 {dimension_numbers = #tpu.dot_dimension_numbers<[1], [0], [0], [1], [0, 0, 1, 1], [], []>} : vector<2x12xf32>, vector<12x128xf32>, vector<2x128xf32> -> vector<2x128xf32>
    %30 = arith.addf %26, %29 : vector<2x128xf32>
    %c0_38 = arith.constant 0 : index
    %c0_39 = arith.constant 0 : index
    %31 = vector.load %arg9[%c0_38, %c0_39] : memref<2x20xf32, #tpu.memory_space<vmem>>, vector<2x20xf32>
    %c0_40 = arith.constant 0 : index
    %c0_41 = arith.constant 0 : index
    %32 = vector.load %arg24[%c0_40, %c0_41] : memref<20x128xf32, #tpu.memory_space<vmem>>, vector<20x128xf32>
    %cst_42 = arith.constant dense<0.000000e+00> : vector<2x128xf32>
    %33 = tpu.matmul %31, %32, %cst_42 {dimension_numbers = #tpu.dot_dimension_numbers<[1], [0], [0], [1], [0, 0, 1, 1], [], []>} : vector<2x20xf32>, vector<20x128xf32>, vector<2x128xf32> -> vector<2x128xf32>
    %34 = arith.addf %30, %33 : vector<2x128xf32>
    %c0_43 = arith.constant 0 : index
    %c0_44 = arith.constant 0 : index
    %35 = vector.load %arg10[%c0_43, %c0_44] : memref<2x20xf32, #tpu.memory_space<vmem>>, vector<2x20xf32>
    %c0_45 = arith.constant 0 : index
    %c0_46 = arith.constant 0 : index
    %36 = vector.load %arg25[%c0_45, %c0_46] : memref<20x128xf32, #tpu.memory_space<vmem>>, vector<20x128xf32>
    %cst_47 = arith.constant dense<0.000000e+00> : vector<2x128xf32>
    %37 = tpu.matmul %35, %36, %cst_47 {dimension_numbers = #tpu.dot_dimension_numbers<[1], [0], [0], [1], [0, 0, 1, 1], [], []>} : vector<2x20xf32>, vector<20x128xf32>, vector<2x128xf32> -> vector<2x128xf32>
    %38 = arith.addf %34, %37 : vector<2x128xf32>
    %c0_48 = arith.constant 0 : index
    %c0_49 = arith.constant 0 : index
    %39 = vector.load %arg11[%c0_48, %c0_49] : memref<2x20xf32, #tpu.memory_space<vmem>>, vector<2x20xf32>
    %c0_50 = arith.constant 0 : index
    %c0_51 = arith.constant 0 : index
    %40 = vector.load %arg26[%c0_50, %c0_51] : memref<20x128xf32, #tpu.memory_space<vmem>>, vector<20x128xf32>
    %cst_52 = arith.constant dense<0.000000e+00> : vector<2x128xf32>
    %41 = tpu.matmul %39, %40, %cst_52 {dimension_numbers = #tpu.dot_dimension_numbers<[1], [0], [0], [1], [0, 0, 1, 1], [], []>} : vector<2x20xf32>, vector<20x128xf32>, vector<2x128xf32> -> vector<2x128xf32>
    %42 = arith.addf %38, %41 : vector<2x128xf32>
    %c0_53 = arith.constant 0 : index
    %c0_54 = arith.constant 0 : index
    %43 = vector.load %arg12[%c0_53, %c0_54] : memref<2x20xf32, #tpu.memory_space<vmem>>, vector<2x20xf32>
    %c0_55 = arith.constant 0 : index
    %c0_56 = arith.constant 0 : index
    %44 = vector.load %arg27[%c0_55, %c0_56] : memref<20x128xf32, #tpu.memory_space<vmem>>, vector<20x128xf32>
    %cst_57 = arith.constant dense<0.000000e+00> : vector<2x128xf32>
    %45 = tpu.matmul %43, %44, %cst_57 {dimension_numbers = #tpu.dot_dimension_numbers<[1], [0], [0], [1], [0, 0, 1, 1], [], []>} : vector<2x20xf32>, vector<20x128xf32>, vector<2x128xf32> -> vector<2x128xf32>
    %46 = arith.addf %42, %45 : vector<2x128xf32>
    %c0_58 = arith.constant 0 : index
    %c0_59 = arith.constant 0 : index
    %47 = vector.load %arg13[%c0_58, %c0_59] : memref<2x20xf32, #tpu.memory_space<vmem>>, vector<2x20xf32>
    %c0_60 = arith.constant 0 : index
    %c0_61 = arith.constant 0 : index
    %48 = vector.load %arg28[%c0_60, %c0_61] : memref<20x128xf32, #tpu.memory_space<vmem>>, vector<20x128xf32>
    %cst_62 = arith.constant dense<0.000000e+00> : vector<2x128xf32>
    %49 = tpu.matmul %47, %48, %cst_62 {dimension_numbers = #tpu.dot_dimension_numbers<[1], [0], [0], [1], [0, 0, 1, 1], [], []>} : vector<2x20xf32>, vector<20x128xf32>, vector<2x128xf32> -> vector<2x128xf32>
    %50 = arith.addf %46, %49 : vector<2x128xf32>
    %c0_63 = arith.constant 0 : index
    %c0_64 = arith.constant 0 : index
    %51 = vector.load %arg14[%c0_63, %c0_64] : memref<2x20xf32, #tpu.memory_space<vmem>>, vector<2x20xf32>
    %c0_65 = arith.constant 0 : index
    %c0_66 = arith.constant 0 : index
    %52 = vector.load %arg29[%c0_65, %c0_66] : memref<20x128xf32, #tpu.memory_space<vmem>>, vector<20x128xf32>
    %cst_67 = arith.constant dense<0.000000e+00> : vector<2x128xf32>
    %53 = tpu.matmul %51, %52, %cst_67 {dimension_numbers = #tpu.dot_dimension_numbers<[1], [0], [0], [1], [0, 0, 1, 1], [], []>} : vector<2x20xf32>, vector<20x128xf32>, vector<2x128xf32> -> vector<2x128xf32>
    %54 = arith.addf %50, %53 : vector<2x128xf32>
    %c0_68 = arith.constant 0 : index
    %c0_69 = arith.constant 0 : index
    %55 = vector.load %arg15[%c0_68, %c0_69] : memref<2x32xf32, #tpu.memory_space<vmem>>, vector<2x32xf32>
    %c0_70 = arith.constant 0 : index
    %c0_71 = arith.constant 0 : index
    %56 = vector.load %arg30[%c0_70, %c0_71] : memref<32x128xf32, #tpu.memory_space<vmem>>, vector<32x128xf32>
    %cst_72 = arith.constant dense<0.000000e+00> : vector<2x128xf32>
    %57 = tpu.matmul %55, %56, %cst_72 {dimension_numbers = #tpu.dot_dimension_numbers<[1], [0], [0], [1], [0, 0, 1, 1], [], []>} : vector<2x32xf32>, vector<32x128xf32>, vector<2x128xf32> -> vector<2x128xf32>
    %58 = arith.addf %54, %57 : vector<2x128xf32>
    %c0_73 = arith.constant 0 : index
    %c0_74 = arith.constant 0 : index
    %59 = vector.load %arg31[%c0_73, %c0_74] : memref<1x128xf32, #tpu.memory_space<vmem>>, vector<1x128xf32>
    %60 = vector.broadcast %59 : vector<1x128xf32> to vector<2x128xf32>
    %61 = arith.addf %58, %60 : vector<2x128xf32>
    %cst_75 = arith.constant 0.000000e+00 : f32
    %62 = vector.broadcast %cst_75 : f32 to vector<2x128xf32>
    %63 = arith.maximumf %61, %62 : vector<2x128xf32>
    %64 = tpu.iota {dimensions = array<i32: 1>} : vector<2x128xi32>
    %c14_i32 = arith.constant 14 : i32
    %65 = vector.broadcast %c14_i32 : i32 to vector<2x128xi32>
    %66 = arith.cmpi slt, %64, %65 : vector<2x128xi32>
    %cst_76 = arith.constant 0.000000e+00 : f32
    %67 = vector.broadcast %cst_76 : f32 to vector<2x128xf32>
    %68 = arith.select %66, %63, %67 : vector<2x128xi1>, vector<2x128xf32>
    %c0_77 = arith.constant 0 : index
    %c0_78 = arith.constant 0 : index
    %69 = vector.load %arg32[%c0_77, %c0_78] : memref<128x128xf32, #tpu.memory_space<vmem>>, vector<128x128xf32>
    %cst_79 = arith.constant dense<0.000000e+00> : vector<2x128xf32>
    %70 = tpu.matmul %63, %69, %cst_79 {dimension_numbers = #tpu.dot_dimension_numbers<[1], [0], [0], [1], [0, 0, 1, 1], [], []>} : vector<2x128xf32>, vector<128x128xf32>, vector<2x128xf32> -> vector<2x128xf32>
    %71 = arith.addf %68, %70 : vector<2x128xf32>
    %c0_80 = arith.constant 0 : index
    %c0_81 = arith.constant 0 : index
    %72 = vector.load %arg33[%c0_80, %c0_81] : memref<1x128xf32, #tpu.memory_space<vmem>>, vector<1x128xf32>
    %73 = vector.broadcast %72 : vector<1x128xf32> to vector<2x128xf32>
    %74 = arith.addf %71, %73 : vector<2x128xf32>
    %c0_82 = arith.constant 0 : index
    %c0_83 = arith.constant 0 : index
    %75 = vector.load %arg34[%c0_82, %c0_83] : memref<2x128xf32, #tpu.memory_space<vmem>>, vector<2x128xf32>
    tpu.vector_store %arg34[%c0_82, %c0_83], %74 {strides = array<i32>} : memref<2x128xf32, #tpu.memory_space<vmem>>, vector<2x128xf32>,
    return
  }
  func.func @transform_0(%arg0: i32) -> (i32, i32) {
    %c0_i32 = arith.constant 0 : i32
    %c0_i32_0 = arith.constant 0 : i32
    return %arg0, %c0_i32 : i32, i32
  }
  func.func @transform_1(%arg0: i32) -> (i32, i32) {
    %c0_i32 = arith.constant 0 : i32
    %c0_i32_0 = arith.constant 0 : i32
    return %arg0, %c0_i32 : i32, i32
  }
  func.func @transform_2(%arg0: i32) -> (i32, i32) {
    %c0_i32 = arith.constant 0 : i32
    %c0_i32_0 = arith.constant 0 : i32
    return %arg0, %c0_i32 : i32, i32
  }
  func.func @transform_3(%arg0: i32) -> (i32, i32) {
    %c0_i32 = arith.constant 0 : i32
    %c0_i32_0 = arith.constant 0 : i32
    return %arg0, %c0_i32 : i32, i32
  }
  func.func @transform_4(%arg0: i32) -> (i32, i32) {
    %c0_i32 = arith.constant 0 : i32
    %c0_i32_0 = arith.constant 0 : i32
    return %arg0, %c0_i32 : i32, i32
  }
  func.func @transform_5(%arg0: i32) -> (i32, i32) {
    %c0_i32 = arith.constant 0 : i32
    %c0_i32_0 = arith.constant 0 : i32
    return %arg0, %c0_i32 : i32, i32
  }
  func.func @transform_6(%arg0: i32) -> (i32, i32) {
    %c0_i32 = arith.constant 0 : i32
    %c0_i32_0 = arith.constant 0 : i32
    return %arg0, %c0_i32 : i32, i32
  }
  func.func @transform_7(%arg0: i32) -> (i32, i32) {
    %c0_i32 = arith.constant 0 : i32
    %c0_i32_0 = arith.constant 0 : i32
    return %arg0, %c0_i32 : i32, i32
  }
  func.func @transform_8(%arg0: i32) -> (i32, i32) {
    %c0_i32 = arith.constant 0 : i32
    %c0_i32_0 = arith.constant 0 : i32
    return %arg0, %c0_i32 : i32, i32
  }
  func.func @transform_9(%arg0: i32) -> (i32, i32) {
    %c0_i32 = arith.constant 0 : i32
    %c0_i32_0 = arith.constant 0 : i32
    return %arg0, %c0_i32 : i32, i32
  }
  func.func @transform_10(%arg0: i32) -> (i32, i32) {
    %c0_i32 = arith.constant 0 : i32
    %c0_i32_0 = arith.constant 0 : i32
    return %arg0, %c0_i32 : i32, i32
  }
  func.func @transform_11(%arg0: i32) -> (i32, i32) {
    %c0_i32 = arith.constant 0 : i32
    %c0_i32_0 = arith.constant 0 : i32
    return %arg0, %c0_i32 : i32, i32
  }
  func.func @transform_12(%arg0: i32) -> (i32, i32) {
    %c0_i32 = arith.constant 0 : i32
    %c0_i32_0 = arith.constant 0 : i32
    return %arg0, %c0_i32 : i32, i32
  }
  func.func @transform_13(%arg0: i32) -> (i32, i32) {
    %c0_i32 = arith.constant 0 : i32
    %c0_i32_0 = arith.constant 0 : i32
    return %arg0, %c0_i32 : i32, i32
  }
  func.func @transform_14(%arg0: i32) -> (i32, i32) {
    %c0_i32 = arith.constant 0 : i32
    %c0_i32_0 = arith.constant 0 : i32
    return %arg0, %c0_i32 : i32, i32
  }
  func.func @transform_15(%arg0: i32) -> (i32, i32) {
    %c0_i32 = arith.constant 0 : i32
    %c0_i32_0 = arith.constant 0 : i32
    %c0_i32_1 = arith.constant 0 : i32
    return %c0_i32, %c0_i32_0 : i32, i32
  }
  func.func @transform_16(%arg0: i32) -> (i32, i32) {
    %c0_i32 = arith.constant 0 : i32
    %c0_i32_0 = arith.constant 0 : i32
    %c0_i32_1 = arith.constant 0 : i32
    return %c0_i32, %c0_i32_0 : i32, i32
  }
  func.func @transform_17(%arg0: i32) -> (i32, i32) {
    %c0_i32 = arith.constant 0 : i32
    %c0_i32_0 = arith.constant 0 : i32
    %c0_i32_1 = arith.constant 0 : i32
    return %c0_i32, %c0_i32_0 : i32, i32
  }
  func.func @transform_18(%arg0: i32) -> (i32, i32) {
    %c0_i32 = arith.constant 0 : i32
    %c0_i32_0 = arith.constant 0 : i32
    %c0_i32_1 = arith.constant 0 : i32
    return %c0_i32, %c0_i32_0 : i32, i32
  }
  func.func @transform_19(%arg0: i32) -> (i32, i32) {
    %c0_i32 = arith.constant 0 : i32
    %c0_i32_0 = arith.constant 0 : i32
    %c0_i32_1 = arith.constant 0 : i32
    return %c0_i32, %c0_i32_0 : i32, i32
  }
  func.func @transform_20(%arg0: i32) -> (i32, i32) {
    %c0_i32 = arith.constant 0 : i32
    %c0_i32_0 = arith.constant 0 : i32
    %c0_i32_1 = arith.constant 0 : i32
    return %c0_i32, %c0_i32_0 : i32, i32
  }
  func.func @transform_21(%arg0: i32) -> (i32, i32) {
    %c0_i32 = arith.constant 0 : i32
    %c0_i32_0 = arith.constant 0 : i32
    %c0_i32_1 = arith.constant 0 : i32
    return %c0_i32, %c0_i32_0 : i32, i32
  }
  func.func @transform_22(%arg0: i32) -> (i32, i32) {
    %c0_i32 = arith.constant 0 : i32
    %c0_i32_0 = arith.constant 0 : i32
    %c0_i32_1 = arith.constant 0 : i32
    return %c0_i32, %c0_i32_0 : i32, i32
  }
  func.func @transform_23(%arg0: i32) -> (i32, i32) {
    %c0_i32 = arith.constant 0 : i32
    %c0_i32_0 = arith.constant 0 : i32
    %c0_i32_1 = arith.constant 0 : i32
    return %c0_i32, %c0_i32_0 : i32, i32
  }
  func.func @transform_24(%arg0: i32) -> (i32, i32) {
    %c0_i32 = arith.constant 0 : i32
    %c0_i32_0 = arith.constant 0 : i32
    %c0_i32_1 = arith.constant 0 : i32
    return %c0_i32, %c0_i32_0 : i32, i32
  }
  func.func @transform_25(%arg0: i32) -> (i32, i32) {
    %c0_i32 = arith.constant 0 : i32
    %c0_i32_0 = arith.constant 0 : i32
    %c0_i32_1 = arith.constant 0 : i32
    return %c0_i32, %c0_i32_0 : i32, i32
  }
  func.func @transform_26(%arg0: i32) -> (i32, i32) {
    %c0_i32 = arith.constant 0 : i32
    %c0_i32_0 = arith.constant 0 : i32
    %c0_i32_1 = arith.constant 0 : i32
    return %c0_i32, %c0_i32_0 : i32, i32
  }
  func.func @transform_27(%arg0: i32) -> (i32, i32) {
    %c0_i32 = arith.constant 0 : i32
    %c0_i32_0 = arith.constant 0 : i32
    %c0_i32_1 = arith.constant 0 : i32
    return %c0_i32, %c0_i32_0 : i32, i32
  }
  func.func @transform_28(%arg0: i32) -> (i32, i32) {
    %c0_i32 = arith.constant 0 : i32
    %c0_i32_0 = arith.constant 0 : i32
    %c0_i32_1 = arith.constant 0 : i32
    return %c0_i32, %c0_i32_0 : i32, i32
  }
  func.func @transform_29(%arg0: i32) -> (i32, i32) {
    %c0_i32 = arith.constant 0 : i32
    %c0_i32_0 = arith.constant 0 : i32
    %c0_i32_1 = arith.constant 0 : i32
    return %c0_i32, %c0_i32_0 : i32, i32
  }
  func.func @transform_30(%arg0: i32) -> (i32, i32) {
    %c0_i32 = arith.constant 0 : i32
    %c0_i32_0 = arith.constant 0 : i32
    %c0_i32_1 = arith.constant 0 : i32
    return %c0_i32, %c0_i32_0 : i32, i32
  }
  func.func @transform_31(%arg0: i32) -> (i32, i32) {
    %c0_i32 = arith.constant 0 : i32
    %c0_i32_0 = arith.constant 0 : i32
    %c0_i32_1 = arith.constant 0 : i32
    return %c0_i32, %c0_i32_0 : i32, i32
  }
  func.func @transform_32(%arg0: i32) -> (i32, i32) {
    %c0_i32 = arith.constant 0 : i32
    %c0_i32_0 = arith.constant 0 : i32
    %c0_i32_1 = arith.constant 0 : i32
    return %c0_i32, %c0_i32_0 : i32, i32
  }
  func.func @transform_33(%arg0: i32) -> (i32, i32) {
    %c0_i32 = arith.constant 0 : i32
    %c0_i32_0 = arith.constant 0 : i32
    return %arg0, %c0_i32 : i32, i32
  }
}

</mosaic_0001>

<llo_original>
// kernel: tpu_custom_call.1
$region0: #{tpu_custom_call.1}
  #allocation0 [shape = 'u32[]', space=smem, size = 0x4, offset = 0x4, fixed_abs, tag = 'smem constant byte address 0x4 - core index']
  #allocation1 [shape = 'u32[144,128]{1,0:T(1,128)}', space=vmem, size = 0x12000, scoped, tag = 'internal scratch']
  %s0 = inlined_call_operand.smem [shape: u32[34], index: -1, kind: input, shape index: {}]
  %s1 = sld [smem:[%s0]]
  %s2 = scalar_lea.smem %s0, 1
  %s3 = sld [smem:[%s2]]
  %s4 = scalar_lea.smem %s0, 2
  %s5 = sld [smem:[%s4]]
  %s6 = scalar_lea.smem %s0, 3
  %s7 = sld [smem:[%s6]]
  %s8 = scalar_lea.smem %s0, 4
  %s9 = sld [smem:[%s8]]
  %s10 = scalar_lea.smem %s0, 5
  %s11 = sld [smem:[%s10]]
  %s12 = scalar_lea.smem %s0, 6
  %s13 = sld [smem:[%s12]]
  %s14 = scalar_lea.smem %s0, 7
  %s15 = sld [smem:[%s14]]
  %s16 = scalar_lea.smem %s0, 8
  %s17 = sld [smem:[%s16]]
  %s18 = scalar_lea.smem %s0, 9
  %s19 = sld [smem:[%s18]]
  %s20 = scalar_lea.smem %s0, 10
  %s21 = sld [smem:[%s20]]
  %s22 = scalar_lea.smem %s0, 11
  %s23 = sld [smem:[%s22]]
  %s24 = scalar_lea.smem %s0, 12
  %s25 = sld [smem:[%s24]]
  %s26 = scalar_lea.smem %s0, 13
  %s27 = sld [smem:[%s26]]
  %s28 = scalar_lea.smem %s0, 14
  %s29 = sld [smem:[%s28]]
  %s30 = scalar_lea.smem %s0, 15
  %s31 = sld [smem:[%s30]]
  %s32 = scalar_lea.smem %s0, 16
  %s33 = sld [smem:[%s32]]
  %s34 = scalar_lea.smem %s0, 17
  %s35 = sld [smem:[%s34]]
  %s36 = scalar_lea.smem %s0, 18
  %s37 = sld [smem:[%s36]]
  %s38 = scalar_lea.smem %s0, 19
  %s39 = sld [smem:[%s38]]
  %s40 = scalar_lea.smem %s0, 20
  %s41 = sld [smem:[%s40]]
  %s42 = scalar_lea.smem %s0, 21
  %s43 = sld [smem:[%s42]]
  %s44 = scalar_lea.smem %s0, 22
  %s45 = sld [smem:[%s44]]
  %s46 = scalar_lea.smem %s0, 23
  %s47 = sld [smem:[%s46]]
  %s48 = scalar_lea.smem %s0, 24
  %s49 = sld [smem:[%s48]]
  %s50 = scalar_lea.smem %s0, 25
  %s51 = sld [smem:[%s50]]
  %s52 = scalar_lea.smem %s0, 26
  %s53 = sld [smem:[%s52]]
  %s54 = scalar_lea.smem %s0, 27
  %s55 = sld [smem:[%s54]]
  %s56 = scalar_lea.smem %s0, 28
  %s57 = sld [smem:[%s56]]
  %s58 = scalar_lea.smem %s0, 29
  %s59 = sld [smem:[%s58]]
  %s60 = scalar_lea.smem %s0, 30
  %s61 = sld [smem:[%s60]]
  %s62 = scalar_lea.smem %s0, 31
  %s63 = sld [smem:[%s62]]
  %s64 = scalar_lea.smem %s0, 32
  %s65 = sld [smem:[%s64]]
  %s66 = scalar_lea.smem %s0, 33
  %s67 = sld [smem:[%s66]]
  %s68 = sld [smem:[#allocation0]]
  $region250: #{tpu_custom_call.1} parent=0
    _
  %s70 = ssub.s32 1, %s68
  %s71 = scalar_select 0, %s70, %s68
  $region1: #{tpu_custom_call.1} parent=0
    #allocation2 [shape = 'u8[1024]{0}', space=vmem, size = 0x400, scoped, tag = 'input window, operand 0, single buffered']
    #allocation3 [shape = 's32[1]{0}', space=sflag, size = 0x4, scoped, tag = 'scoped memory for tpu_custom_call.1']
    #allocation4 [shape = 's32[1]{0}', space=sflag, size = 0x4, scoped, tag = 'scoped memory for tpu_custom_call.1']
    #allocation5 [shape = 'u8[1024]{0}', space=vmem, size = 0x400, scoped, tag = 'input window, operand 1, single buffered']
    #allocation6 [shape = 's32[1]{0}', space=sflag, size = 0x4, scoped, tag = 'scoped memory for tpu_custom_call.1']
    #allocation7 [shape = 'u8[1024]{0}', space=vmem, size = 0x400, scoped, tag = 'input window, operand 4, single buffered']
    #allocation8 [shape = 'u8[1024]{0}', space=vmem, size = 0x400, scoped, tag = 'input window, operand 5, single buffered']
    #allocation9 [shape = 's32[1]{0}', space=sflag, size = 0x4, scoped, tag = 'scoped memory for tpu_custom_call.1']
    #allocation10 [shape = 'u8[1024]{0}', space=vmem, size = 0x400, scoped, tag = 'input window, operand 6, single buffered']
    #allocation11 [shape = 'u8[1024]{0}', space=vmem, size = 0x400, scoped, tag = 'input window, operand 7, single buffered']
    #allocation12 [shape = 's32[1]{0}', space=sflag, size = 0x4, scoped, tag = 'scoped memory for tpu_custom_call.1']
    #allocation13 [shape = 'u8[1024]{0}', space=vmem, size = 0x400, scoped, tag = 'input window, operand 8, single buffered']
    #allocation14 [shape = 'u8[1024]{0}', space=vmem, size = 0x400, scoped, tag = 'input window, operand 9, single buffered']
    #allocation15 [shape = 's32[1]{0}', space=sflag, size = 0x4, scoped, tag = 'scoped memory for tpu_custom_call.1']
    #allocation16 [shape = 'u8[1024]{0}', space=vmem, size = 0x400, scoped, tag = 'input window, operand 10, single buffered']
    #allocation17 [shape = 'u8[1024]{0}', space=vmem, size = 0x400, scoped, tag = 'input window, operand 11, single buffered']
    #allocation18 [shape = 's32[1]{0}', space=sflag, size = 0x4, scoped, tag = 'scoped memory for tpu_custom_call.1']
    #allocation19 [shape = 'u8[1024]{0}', space=vmem, size = 0x400, scoped, tag = 'input window, operand 12, single buffered']
    #allocation20 [shape = 'u8[1024]{0}', space=vmem, size = 0x400, scoped, tag = 'input window, operand 13, single buffered']
    #allocation21 [shape = 's32[1]{0}', space=sflag, size = 0x4, scoped, tag = 'scoped memory for tpu_custom_call.1']
    #allocation22 [shape = 'u8[1024]{0}', space=vmem, size = 0x400, scoped, tag = 'input window, operand 14, single buffered']
    #allocation23 [shape = 'u8[8192]{0}', space=vmem, size = 0x2000, scoped, tag = 'input window, operand 16, single buffered']
    #allocation24 [shape = 's32[1]{0}', space=sflag, size = 0x4, scoped, tag = 'scoped memory for tpu_custom_call.1']
    #allocation25 [shape = 'u8[8192]{0}', space=vmem, size = 0x2000, scoped, tag = 'input window, operand 17, single buffered']
    #allocation26 [shape = 'u8[8192]{0}', space=vmem, size = 0x2000, scoped, tag = 'input window, operand 18, single buffered']
    #allocation27 [shape = 's32[1]{0}', space=sflag, size = 0x4, scoped, tag = 'scoped memory for tpu_custom_call.1']
    #allocation28 [shape = 'u8[8192]{0}', space=vmem, size = 0x2000, scoped, tag = 'input window, operand 19, single buffered']
    #allocation29 [shape = 'u8[8192]{0}', space=vmem, size = 0x2000, scoped, tag = 'input window, operand 20, single buffered']
    #allocation30 [shape = 's32[1]{0}', space=sflag, size = 0x4, scoped, tag = 'scoped memory for tpu_custom_call.1']
    #allocation31 [shape = 'u8[8192]{0}', space=vmem, size = 0x2000, scoped, tag = 'input window, operand 21, single buffered']
    #allocation32 [shape = 'u8[8192]{0}', space=vmem, size = 0x2000, scoped, tag = 'input window, operand 22, single buffered']
    #allocation33 [shape = 's32[1]{0}', space=sflag, size = 0x4, scoped, tag = 'scoped memory for tpu_custom_call.1']
    #allocation34 [shape = 'u8[12288]{0}', space=vmem, size = 0x3000, scoped, tag = 'input window, operand 23, single buffered']
    #allocation35 [shape = 'u8[12288]{0}', space=vmem, size = 0x3000, scoped, tag = 'input window, operand 24, single buffered']
    #allocation36 [shape = 's32[1]{0}', space=sflag, size = 0x4, scoped, tag = 'scoped memory for tpu_custom_call.1']
    #allocation37 [shape = 'u8[12288]{0}', space=vmem, size = 0x3000, scoped, tag = 'input window, operand 25, single buffered']
    #allocation38 [shape = 'u8[12288]{0}', space=vmem, size = 0x3000, scoped, tag = 'input window, operand 26, single buffered']
    #allocation39 [shape = 's32[1]{0}', space=sflag, size = 0x4, scoped, tag = 'scoped memory for tpu_custom_call.1']
    #allocation40 [shape = 'u8[12288]{0}', space=vmem, size = 0x3000, scoped, tag = 'input window, operand 27, single buffered']
    #allocation41 [shape = 'u8[12288]{0}', space=vmem, size = 0x3000, scoped, tag = 'input window, operand 28, single buffered']
    #allocation42 [shape = 's32[1]{0}', space=sflag, size = 0x4, scoped, tag = 'scoped memory for tpu_custom_call.1']
    #allocation43 [shape = 'u8[65536]{0}', space=vmem, size = 0x10000, scoped, tag = 'input window, operand 31, single buffered']
    #allocation44 [shape = 'u8[1024]{0}', space=vmem, size = 0x400, scoped, tag = 'output window, operand 0, single buffered']
    %72 = vsyncpa [#allocation3], 0
    %73 = vsyncpa [#allocation6], 0
    %74 = vsyncpa [#allocation9], 0
    %75 = vsyncpa [#allocation12], 0
    %76 = vsyncpa [#allocation15], 0
    %77 = vsyncpa [#allocation18], 0
    %78 = vsyncpa [#allocation21], 0
    %79 = vsyncpa [#allocation24], 0
    %80 = vsyncpa [#allocation27], 0
    %81 = vsyncpa [#allocation30], 0
    %82 = vsyncpa [#allocation33], 0
    %83 = vsyncpa [#allocation36], 0
    %84 = vsyncpa [#allocation39], 0
    %85 = vsyncpa [#allocation42], 0
    %86 = vsyncpa [#allocation4], 0
    // Predicated region
    $region2: #{tpu_custom_call.1} parent=1 // pred_check
      _
    $region3: #{tpu_custom_call.1} parent=1 // pred_check_branch
      %88 = sbr.rel (0) target = $region5
    $region4: #{tpu_custom_call.1} parent=1 // pred_region
      %s90 = ssub.s32 32, 32
      %91 = vsyncadd [#allocation3], %s90
      %s93 = sshll.u32 [#allocation2], 4
      %s94 = int_to_ptr.vmem [resolvable:$true] %s93
      %96 = dma.hbm_to_vmem [thread:$0]  %s1, 32, %s94, [#allocation3]
    $region5: #{tpu_custom_call.1} parent=1 // pred_fallthru
      _
    // Predicated region
    $region6: #{tpu_custom_call.1} parent=1 // pred_check
      _
    $region7: #{tpu_custom_call.1} parent=1 // pred_check_branch
      %98 = sbr.rel (0) target = $region9
    $region8: #{tpu_custom_call.1} parent=1 // pred_region
      %s100 = ssub.s32 32, 32
      %101 = vsyncadd [#allocation6], %s100
      %s103 = sshll.u32 [#allocation5], 4
      %s104 = int_to_ptr.vmem [resolvable:$true] %s103
      %106 = dma.hbm_to_vmem [thread:$0]  %s3, 32, %s104, [#allocation6]
    $region9: #{tpu_custom_call.1} parent=1 // pred_fallthru
      _
    // Predicated region
    $region10: #{tpu_custom_call.1} parent=1 // pred_check
      _
    $region11: #{tpu_custom_call.1} parent=1 // pred_check_branch
      %108 = sbr.rel (0) target = $region13
    $region12: #{tpu_custom_call.1} parent=1 // pred_region
      _
    $region13: #{tpu_custom_call.1} parent=1 // pred_fallthru
      _
    // Predicated region
    $region14: #{tpu_custom_call.1} parent=1 // pred_check
      _
    $region15: #{tpu_custom_call.1} parent=1 // pred_check_branch
      %110 = sbr.rel (0) target = $region17
    $region16: #{tpu_custom_call.1} parent=1 // pred_region
      _
    $region17: #{tpu_custom_call.1} parent=1 // pred_fallthru
      _
    // Predicated region
    $region18: #{tpu_custom_call.1} parent=1 // pred_check
      _
    $region19: #{tpu_custom_call.1} parent=1 // pred_check_branch
      %112 = sbr.rel (0) target = $region21
    $region20: #{tpu_custom_call.1} parent=1 // pred_region
      %s114 = ssub.s32 32, 32
      %115 = vsyncadd [#allocation6], %s114
      %s117 = sshll.u32 [#allocation7], 4
      %s118 = int_to_ptr.vmem [resolvable:$true] %s117
      %120 = dma.hbm_to_vmem [thread:$0]  %s9, 32, %s118, [#allocation6]
    $region21: #{tpu_custom_call.1} parent=1 // pred_fallthru
      _
    // Predicated region
    $region22: #{tpu_custom_call.1} parent=1 // pred_check
      _
    $region23: #{tpu_custom_call.1} parent=1 // pred_check_branch
      %122 = sbr.rel (0) target = $region25
    $region24: #{tpu_custom_call.1} parent=1 // pred_region
      %s124 = ssub.s32 32, 32
      %125 = vsyncadd [#allocation9], %s124
      %s127 = sshll.u32 [#allocation8], 4
      %s128 = int_to_ptr.vmem [resolvable:$true] %s127
      %130 = dma.hbm_to_vmem [thread:$0]  %s11, 32, %s128, [#allocation9]
    $region25: #{tpu_custom_call.1} parent=1 // pred_fallthru
      _
    // Predicated region
    $region26: #{tpu_custom_call.1} parent=1 // pred_check
      _
    $region27: #{tpu_custom_call.1} parent=1 // pred_check_branch
      %132 = sbr.rel (0) target = $region29
    $region28: #{tpu_custom_call.1} parent=1 // pred_region
      %s134 = ssub.s32 32, 32
      %135 = vsyncadd [#allocation9], %s134
      %s137 = sshll.u32 [#allocation10], 4
      %s138 = int_to_ptr.vmem [resolvable:$true] %s137
      %140 = dma.hbm_to_vmem [thread:$0]  %s13, 32, %s138, [#allocation9]
    $region29: #{tpu_custom_call.1} parent=1 // pred_fallthru
      _
    // Predicated region
    $region30: #{tpu_custom_call.1} parent=1 // pred_check
      _
    $region31: #{tpu_custom_call.1} parent=1 // pred_check_branch
      %142 = sbr.rel (0) target = $region33
    $region32: #{tpu_custom_call.1} parent=1 // pred_region
      %s144 = ssub.s32 32, 32
      %145 = vsyncadd [#allocation12], %s144
      %s147 = sshll.u32 [#allocation11], 4
      %s148 = int_to_ptr.vmem [resolvable:$true] %s147
      %150 = dma.hbm_to_vmem [thread:$0]  %s15, 32, %s148, [#allocation12]
    $region33: #{tpu_custom_call.1} parent=1 // pred_fallthru
      _
    // Predicated region
    $region34: #{tpu_custom_call.1} parent=1 // pred_check
      _
    $region35: #{tpu_custom_call.1} parent=1 // pred_check_branch
      %152 = sbr.rel (0) target = $region37
    $region36: #{tpu_custom_call.1} parent=1 // pred_region
      %s154 = ssub.s32 32, 32
      %155 = vsyncadd [#allocation12], %s154
      %s157 = sshll.u32 [#allocation13], 4
      %s158 = int_to_ptr.vmem [resolvable:$true] %s157
      %160 = dma.hbm_to_vmem [thread:$0]  %s17, 32, %s158, [#allocation12]
    $region37: #{tpu_custom_call.1} parent=1 // pred_fallthru
      _
    // Predicated region
    $region38: #{tpu_custom_call.1} parent=1 // pred_check
      _
    $region39: #{tpu_custom_call.1} parent=1 // pred_check_branch
      %162 = sbr.rel (0) target = $region41
    $region40: #{tpu_custom_call.1} parent=1 // pred_region
      %s164 = ssub.s32 32, 32
      %165 = vsyncadd [#allocation15], %s164
      %s167 = sshll.u32 [#allocation14], 4
      %s168 = int_to_ptr.vmem [resolvable:$true] %s167
      %170 = dma.hbm_to_vmem [thread:$0]  %s19, 32, %s168, [#allocation15]
    $region41: #{tpu_custom_call.1} parent=1 // pred_fallthru
      _
    // Predicated region
    $region42: #{tpu_custom_call.1} parent=1 // pred_check
      _
    $region43: #{tpu_custom_call.1} parent=1 // pred_check_branch
      %172 = sbr.rel (0) target = $region45
    $region44: #{tpu_custom_call.1} parent=1 // pred_region
      %s174 = ssub.s32 32, 32
      %175 = vsyncadd [#allocation15], %s174
      %s177 = sshll.u32 [#allocation16], 4
      %s178 = int_to_ptr.vmem [resolvable:$true] %s177
      %180 = dma.hbm_to_vmem [thread:$0]  %s21, 32, %s178, [#allocation15]
    $region45: #{tpu_custom_call.1} parent=1 // pred_fallthru
      _
    // Predicated region
    $region46: #{tpu_custom_call.1} parent=1 // pred_check
      _
    $region47: #{tpu_custom_call.1} parent=1 // pred_check_branch
      %182 = sbr.rel (0) target = $region49
    $region48: #{tpu_custom_call.1} parent=1 // pred_region
      %s184 = ssub.s32 32, 32
      %185 = vsyncadd [#allocation18], %s184
      %s187 = sshll.u32 [#allocation17], 4
      %s188 = int_to_ptr.vmem [resolvable:$true] %s187
      %190 = dma.hbm_to_vmem [thread:$0]  %s23, 32, %s188, [#allocation18]
    $region49: #{tpu_custom_call.1} parent=1 // pred_fallthru
      _
    // Predicated region
    $region50: #{tpu_custom_call.1} parent=1 // pred_check
      _
    $region51: #{tpu_custom_call.1} parent=1 // pred_check_branch
      %192 = sbr.rel (0) target = $region53
    $region52: #{tpu_custom_call.1} parent=1 // pred_region
      %s194 = ssub.s32 32, 32
      %195 = vsyncadd [#allocation18], %s194
      %s197 = sshll.u32 [#allocation19], 4
      %s198 = int_to_ptr.vmem [resolvable:$true] %s197
      %200 = dma.hbm_to_vmem [thread:$0]  %s25, 32, %s198, [#allocation18]
    $region53: #{tpu_custom_call.1} parent=1 // pred_fallthru
      _
    // Predicated region
    $region54: #{tpu_custom_call.1} parent=1 // pred_check
      _
    $region55: #{tpu_custom_call.1} parent=1 // pred_check_branch
      %202 = sbr.rel (0) target = $region57
    $region56: #{tpu_custom_call.1} parent=1 // pred_region
      %s204 = ssub.s32 32, 32
      %205 = vsyncadd [#allocation21], %s204
      %s207 = sshll.u32 [#allocation20], 4
      %s208 = int_to_ptr.vmem [resolvable:$true] %s207
      %210 = dma.hbm_to_vmem [thread:$0]  %s27, 32, %s208, [#allocation21]
    $region57: #{tpu_custom_call.1} parent=1 // pred_fallthru
      _
    // Predicated region
    $region58: #{tpu_custom_call.1} parent=1 // pred_check
      _
    $region59: #{tpu_custom_call.1} parent=1 // pred_check_branch
      %212 = sbr.rel (0) target = $region61
    $region60: #{tpu_custom_call.1} parent=1 // pred_region
      %s214 = ssub.s32 32, 32
      %215 = vsyncadd [#allocation21], %s214
      %s217 = sshll.u32 [#allocation22], 4
      %s218 = int_to_ptr.vmem [resolvable:$true] %s217
      %220 = dma.hbm_to_vmem [thread:$0]  %s29, 32, %s218, [#allocation21]
    $region61: #{tpu_custom_call.1} parent=1 // pred_fallthru
      _
    // Predicated region
    $region62: #{tpu_custom_call.1} parent=1 // pred_check
      _
    $region63: #{tpu_custom_call.1} parent=1 // pred_check_branch
      %222 = sbr.rel (0) target = $region65
    $region64: #{tpu_custom_call.1} parent=1 // pred_region
      _
    $region65: #{tpu_custom_call.1} parent=1 // pred_fallthru
      _
    // Predicated region
    $region66: #{tpu_custom_call.1} parent=1 // pred_check
      _
    $region67: #{tpu_custom_call.1} parent=1 // pred_check_branch
      %224 = sbr.rel (0) target = $region69
    $region68: #{tpu_custom_call.1} parent=1 // pred_region
      %s226 = ssub.s32 256, 256
      %227 = vsyncadd [#allocation24], %s226
      %s228 = sshll.u32 [#allocation23], 4
      %s229 = int_to_ptr.vmem [resolvable:$true] %s228
      %234 = dma.hbm_to_vmem [thread:$0]  %s33, 256, %s229, [#allocation24], 128, 128, 8
    $region69: #{tpu_custom_call.1} parent=1 // pred_fallthru
      _
    // Predicated region
    $region70: #{tpu_custom_call.1} parent=1 // pred_check
      _
    $region71: #{tpu_custom_call.1} parent=1 // pred_check_branch
      %236 = sbr.rel (0) target = $region73
    $region72: #{tpu_custom_call.1} parent=1 // pred_region
      %s238 = ssub.s32 256, 256
      %239 = vsyncadd [#allocation24], %s238
      %s240 = sshll.u32 [#allocation25], 4
      %s241 = int_to_ptr.vmem [resolvable:$true] %s240
      %246 = dma.hbm_to_vmem [thread:$0]  %s35, 256, %s241, [#allocation24], 128, 128, 8
    $region73: #{tpu_custom_call.1} parent=1 // pred_fallthru
      _
    // Predicated region
    $region74: #{tpu_custom_call.1} parent=1 // pred_check
      _
    $region75: #{tpu_custom_call.1} parent=1 // pred_check_branch
      %248 = sbr.rel (0) target = $region77
    $region76: #{tpu_custom_call.1} parent=1 // pred_region
      %s250 = ssub.s32 256, 256
      %251 = vsyncadd [#allocation27], %s250
      %s252 = sshll.u32 [#allocation26], 4
      %s253 = int_to_ptr.vmem [resolvable:$true] %s252
      %258 = dma.hbm_to_vmem [thread:$0]  %s37, 256, %s253, [#allocation27], 128, 128, 8
    $region77: #{tpu_custom_call.1} parent=1 // pred_fallthru
      _
    // Predicated region
    $region78: #{tpu_custom_call.1} parent=1 // pred_check
      _
    $region79: #{tpu_custom_call.1} parent=1 // pred_check_branch
      %260 = sbr.rel (0) target = $region81
    $region80: #{tpu_custom_call.1} parent=1 // pred_region
      %s262 = ssub.s32 256, 256
      %263 = vsyncadd [#allocation27], %s262
      %s264 = sshll.u32 [#allocation28], 4
      %s265 = int_to_ptr.vmem [resolvable:$true] %s264
      %270 = dma.hbm_to_vmem [thread:$0]  %s39, 256, %s265, [#allocation27], 128, 128, 8
    $region81: #{tpu_custom_call.1} parent=1 // pred_fallthru
      _
    // Predicated region
    $region82: #{tpu_custom_call.1} parent=1 // pred_check
      _
    $region83: #{tpu_custom_call.1} parent=1 // pred_check_branch
      %272 = sbr.rel (0) target = $region85
    $region84: #{tpu_custom_call.1} parent=1 // pred_region
      %s274 = ssub.s32 256, 256
      %275 = vsyncadd [#allocation30], %s274
      %s276 = sshll.u32 [#allocation29], 4
      %s277 = int_to_ptr.vmem [resolvable:$true] %s276
      %282 = dma.hbm_to_vmem [thread:$0]  %s41, 256, %s277, [#allocation30], 128, 128, 8
    $region85: #{tpu_custom_call.1} parent=1 // pred_fallthru
      _
    // Predicated region
    $region86: #{tpu_custom_call.1} parent=1 // pred_check
      _
    $region87: #{tpu_custom_call.1} parent=1 // pred_check_branch
      %284 = sbr.rel (0) target = $region89
    $region88: #{tpu_custom_call.1} parent=1 // pred_region
      %s286 = ssub.s32 256, 256
      %287 = vsyncadd [#allocation30], %s286
      %s288 = sshll.u32 [#allocation31], 4
      %s289 = int_to_ptr.vmem [resolvable:$true] %s288
      %294 = dma.hbm_to_vmem [thread:$0]  %s43, 256, %s289, [#allocation30], 128, 128, 8
    $region89: #{tpu_custom_call.1} parent=1 // pred_fallthru
      _
    // Predicated region
    $region90: #{tpu_custom_call.1} parent=1 // pred_check
      _
    $region91: #{tpu_custom_call.1} parent=1 // pred_check_branch
      %296 = sbr.rel (0) target = $region93
    $region92: #{tpu_custom_call.1} parent=1 // pred_region
      %s298 = ssub.s32 256, 256
      %299 = vsyncadd [#allocation33], %s298
      %s300 = sshll.u32 [#allocation32], 4
      %s301 = int_to_ptr.vmem [resolvable:$true] %s300
      %306 = dma.hbm_to_vmem [thread:$0]  %s45, 256, %s301, [#allocation33], 128, 128, 8
    $region93: #{tpu_custom_call.1} parent=1 // pred_fallthru
      _
    // Predicated region
    $region94: #{tpu_custom_call.1} parent=1 // pred_check
      _
    $region95: #{tpu_custom_call.1} parent=1 // pred_check_branch
      %308 = sbr.rel (0) target = $region97
    $region96: #{tpu_custom_call.1} parent=1 // pred_region
      %s310 = ssub.s32 384, 384
      %311 = vsyncadd [#allocation33], %s310
      %s312 = sshll.u32 [#allocation34], 4
      %s313 = int_to_ptr.vmem [resolvable:$true] %s312
      %318 = dma.hbm_to_vmem [thread:$0]  %s47, 384, %s313, [#allocation33], 128, 128, 8
    $region97: #{tpu_custom_call.1} parent=1 // pred_fallthru
      _
    // Predicated region
    $region98: #{tpu_custom_call.1} parent=1 // pred_check
      _
    $region99: #{tpu_custom_call.1} parent=1 // pred_check_branch
      %320 = sbr.rel (0) target = $region101
    $region100: #{tpu_custom_call.1} parent=1 // pred_region
      %s322 = ssub.s32 384, 384
      %323 = vsyncadd [#allocation36], %s322
      %s324 = sshll.u32 [#allocation35], 4
      %s325 = int_to_ptr.vmem [resolvable:$true] %s324
      %330 = dma.hbm_to_vmem [thread:$0]  %s49, 384, %s325, [#allocation36], 128, 128, 8
    $region101: #{tpu_custom_call.1} parent=1 // pred_fallthru
      _
    // Predicated region
    $region102: #{tpu_custom_call.1} parent=1 // pred_check
      _
    $region103: #{tpu_custom_call.1} parent=1 // pred_check_branch
      %332 = sbr.rel (0) target = $region105
    $region104: #{tpu_custom_call.1} parent=1 // pred_region
      %s334 = ssub.s32 384, 384
      %335 = vsyncadd [#allocation36], %s334
      %s336 = sshll.u32 [#allocation37], 4
      %s337 = int_to_ptr.vmem [resolvable:$true] %s336
      %342 = dma.hbm_to_vmem [thread:$0]  %s51, 384, %s337, [#allocation36], 128, 128, 8
    $region105: #{tpu_custom_call.1} parent=1 // pred_fallthru
      _
    // Predicated region
    $region106: #{tpu_custom_call.1} parent=1 // pred_check
      _
    $region107: #{tpu_custom_call.1} parent=1 // pred_check_branch
      %344 = sbr.rel (0) target = $region109
    $region108: #{tpu_custom_call.1} parent=1 // pred_region
      %s346 = ssub.s32 384, 384
      %347 = vsyncadd [#allocation39], %s346
      %s348 = sshll.u32 [#allocation38], 4
      %s349 = int_to_ptr.vmem [resolvable:$true] %s348
      %354 = dma.hbm_to_vmem [thread:$0]  %s53, 384, %s349, [#allocation39], 128, 128, 8
    $region109: #{tpu_custom_call.1} parent=1 // pred_fallthru
      _
    // Predicated region
    $region110: #{tpu_custom_call.1} parent=1 // pred_check
      _
    $region111: #{tpu_custom_call.1} parent=1 // pred_check_branch
      %356 = sbr.rel (0) target = $region113
    $region112: #{tpu_custom_call.1} parent=1 // pred_region
      %s358 = ssub.s32 384, 384
      %359 = vsyncadd [#allocation39], %s358
      %s360 = sshll.u32 [#allocation40], 4
      %s361 = int_to_ptr.vmem [resolvable:$true] %s360
      %366 = dma.hbm_to_vmem [thread:$0]  %s55, 384, %s361, [#allocation39], 128, 128, 8
    $region113: #{tpu_custom_call.1} parent=1 // pred_fallthru
      _
    // Predicated region
    $region114: #{tpu_custom_call.1} parent=1 // pred_check
      _
    $region115: #{tpu_custom_call.1} parent=1 // pred_check_branch
      %368 = sbr.rel (0) target = $region117
    $region116: #{tpu_custom_call.1} parent=1 // pred_region
      %s370 = ssub.s32 384, 384
      %371 = vsyncadd [#allocation42], %s370
      %s372 = sshll.u32 [#allocation41], 4
      %s373 = int_to_ptr.vmem [resolvable:$true] %s372
      %378 = dma.hbm_to_vmem [thread:$0]  %s57, 384, %s373, [#allocation42], 128, 128, 8
    $region117: #{tpu_custom_call.1} parent=1 // pred_fallthru
      _
    // Predicated region
    $region118: #{tpu_custom_call.1} parent=1 // pred_check
      _
    $region119: #{tpu_custom_call.1} parent=1 // pred_check_branch
      %380 = sbr.rel (0) target = $region121
    $region120: #{tpu_custom_call.1} parent=1 // pred_region
      _
    $region121: #{tpu_custom_call.1} parent=1 // pred_fallthru
      _
    // Predicated region
    $region122: #{tpu_custom_call.1} parent=1 // pred_check
      _
    $region123: #{tpu_custom_call.1} parent=1 // pred_check_branch
      %382 = sbr.rel (0) target = $region125
    $region124: #{tpu_custom_call.1} parent=1 // pred_region
      _
    $region125: #{tpu_custom_call.1} parent=1 // pred_fallthru
      _
    // Predicated region
    $region126: #{tpu_custom_call.1} parent=1 // pred_check
      _
    $region127: #{tpu_custom_call.1} parent=1 // pred_check_branch
      %384 = sbr.rel (0) target = $region129
    $region128: #{tpu_custom_call.1} parent=1 // pred_region
      %s386 = ssub.s32 2048, 2048
      %387 = vsyncadd [#allocation42], %s386
      %s388 = sshll.u32 [#allocation43], 4
      %s389 = int_to_ptr.vmem [resolvable:$true] %s388
      %394 = dma.hbm_to_vmem [thread:$0]  %s63, 2048, %s389, [#allocation42], 128, 128, 8
    $region129: #{tpu_custom_call.1} parent=1 // pred_fallthru
      _
    // Predicated region
    $region130: #{tpu_custom_call.1} parent=1 // pred_check
      _
    $region131: #{tpu_custom_call.1} parent=1 // pred_check_branch
      %396 = sbr.rel (0) target = $region133
    $region132: #{tpu_custom_call.1} parent=1 // pred_region
      _
    $region133: #{tpu_custom_call.1} parent=1 // pred_fallthru
      _
    // Predicated region
    $region134: #{tpu_custom_call.1} parent=1 // pred_check
      _
    $region135: #{tpu_custom_call.1} parent=1 // pred_check_branch
      %398 = sbr.rel (0) target = $region137
    $region136: #{tpu_custom_call.1} parent=1 // pred_region
      %399 = dma.done [#allocation3], 32
    $region137: #{tpu_custom_call.1} parent=1 // pred_fallthru
      _
    // Predicated region
    $region138: #{tpu_custom_call.1} parent=1 // pred_check
      _
    $region139: #{tpu_custom_call.1} parent=1 // pred_check_branch
      %401 = sbr.rel (0) target = $region141
    $region140: #{tpu_custom_call.1} parent=1 // pred_region
      %402 = dma.done [#allocation6], 32
    $region141: #{tpu_custom_call.1} parent=1 // pred_fallthru
      _
    // Predicated region
    $region142: #{tpu_custom_call.1} parent=1 // pred_check
      _
    $region143: #{tpu_custom_call.1} parent=1 // pred_check_branch
      %404 = sbr.rel (0) target = $region145
    $region144: #{tpu_custom_call.1} parent=1 // pred_region
      %405 = dma.done [#allocation6], 32
    $region145: #{tpu_custom_call.1} parent=1 // pred_fallthru
      _
    // Predicated region
    $region146: #{tpu_custom_call.1} parent=1 // pred_check
      _
    $region147: #{tpu_custom_call.1} parent=1 // pred_check_branch
      %407 = sbr.rel (0) target = $region149
    $region148: #{tpu_custom_call.1} parent=1 // pred_region
      %408 = dma.done [#allocation9], 32
    $region149: #{tpu_custom_call.1} parent=1 // pred_fallthru
      _
    // Predicated region
    $region150: #{tpu_custom_call.1} parent=1 // pred_check
      _
    $region151: #{tpu_custom_call.1} parent=1 // pred_check_branch
      %410 = sbr.rel (0) target = $region153
    $region152: #{tpu_custom_call.1} parent=1 // pred_region
      %411 = dma.done [#allocation9], 32
    $region153: #{tpu_custom_call.1} parent=1 // pred_fallthru
      _
    // Predicated region
    $region154: #{tpu_custom_call.1} parent=1 // pred_check
      _
    $region155: #{tpu_custom_call.1} parent=1 // pred_check_branch
      %413 = sbr.rel (0) target = $region157
    $region156: #{tpu_custom_call.1} parent=1 // pred_region
      %414 = dma.done [#allocation12], 32
    $region157: #{tpu_custom_call.1} parent=1 // pred_fallthru
      _
    // Predicated region
    $region158: #{tpu_custom_call.1} parent=1 // pred_check
      _
    $region159: #{tpu_custom_call.1} parent=1 // pred_check_branch
      %416 = sbr.rel (0) target = $region161
    $region160: #{tpu_custom_call.1} parent=1 // pred_region
      %417 = dma.done [#allocation12], 32
    $region161: #{tpu_custom_call.1} parent=1 // pred_fallthru
      _
    // Predicated region
    $region162: #{tpu_custom_call.1} parent=1 // pred_check
      _
    $region163: #{tpu_custom_call.1} parent=1 // pred_check_branch
      %419 = sbr.rel (0) target = $region165
    $region164: #{tpu_custom_call.1} parent=1 // pred_region
      %420 = dma.done [#allocation15], 32
    $region165: #{tpu_custom_call.1} parent=1 // pred_fallthru
      _
    // Predicated region
    $region166: #{tpu_custom_call.1} parent=1 // pred_check
      _
    $region167: #{tpu_custom_call.1} parent=1 // pred_check_branch
      %422 = sbr.rel (0) target = $region169
    $region168: #{tpu_custom_call.1} parent=1 // pred_region
      %423 = dma.done [#allocation15], 32
    $region169: #{tpu_custom_call.1} parent=1 // pred_fallthru
      _
    // Predicated region
    $region170: #{tpu_custom_call.1} parent=1 // pred_check
      _
    $region171: #{tpu_custom_call.1} parent=1 // pred_check_branch
      %425 = sbr.rel (0) target = $region173
    $region172: #{tpu_custom_call.1} parent=1 // pred_region
      %426 = dma.done [#allocation18], 32
    $region173: #{tpu_custom_call.1} parent=1 // pred_fallthru
      _
    // Predicated region
    $region174: #{tpu_custom_call.1} parent=1 // pred_check
      _
    $region175: #{tpu_custom_call.1} parent=1 // pred_check_branch
      %428 = sbr.rel (0) target = $region177
    $region176: #{tpu_custom_call.1} parent=1 // pred_region
      %429 = dma.done [#allocation18], 32
    $region177: #{tpu_custom_call.1} parent=1 // pred_fallthru
      _
    // Predicated region
    $region178: #{tpu_custom_call.1} parent=1 // pred_check
      _
    $region179: #{tpu_custom_call.1} parent=1 // pred_check_branch
      %431 = sbr.rel (0) target = $region181
    $region180: #{tpu_custom_call.1} parent=1 // pred_region
      %432 = dma.done [#allocation21], 32
    $region181: #{tpu_custom_call.1} parent=1 // pred_fallthru
      _
    // Predicated region
    $region182: #{tpu_custom_call.1} parent=1 // pred_check
      _
    $region183: #{tpu_custom_call.1} parent=1 // pred_check_branch
      %434 = sbr.rel (0) target = $region185
    $region184: #{tpu_custom_call.1} parent=1 // pred_region
      %435 = dma.done [#allocation21], 32
    $region185: #{tpu_custom_call.1} parent=1 // pred_fallthru
      _
    // Predicated region
    $region186: #{tpu_custom_call.1} parent=1 // pred_check
      _
    $region187: #{tpu_custom_call.1} parent=1 // pred_check_branch
      %437 = sbr.rel (0) target = $region189
    $region188: #{tpu_custom_call.1} parent=1 // pred_region
      %438 = dma.done [#allocation24], 256
    $region189: #{tpu_custom_call.1} parent=1 // pred_fallthru
      _
    // Predicated region
    $region190: #{tpu_custom_call.1} parent=1 // pred_check
      _
    $region191: #{tpu_custom_call.1} parent=1 // pred_check_branch
      %440 = sbr.rel (0) target = $region193
    $region192: #{tpu_custom_call.1} parent=1 // pred_region
      %441 = dma.done [#allocation24], 256
    $region193: #{tpu_custom_call.1} parent=1 // pred_fallthru
      _
    // Predicated region
    $region194: #{tpu_custom_call.1} parent=1 // pred_check
      _
    $region195: #{tpu_custom_call.1} parent=1 // pred_check_branch
      %443 = sbr.rel (0) target = $region197
    $region196: #{tpu_custom_call.1} parent=1 // pred_region
      %444 = dma.done [#allocation27], 256
    $region197: #{tpu_custom_call.1} parent=1 // pred_fallthru
      _
    // Predicated region
    $region198: #{tpu_custom_call.1} parent=1 // pred_check
      _
    $region199: #{tpu_custom_call.1} parent=1 // pred_check_branch
      %446 = sbr.rel (0) target = $region201
    $region200: #{tpu_custom_call.1} parent=1 // pred_region
      %447 = dma.done [#allocation27], 256
    $region201: #{tpu_custom_call.1} parent=1 // pred_fallthru
      _
    // Predicated region
    $region202: #{tpu_custom_call.1} parent=1 // pred_check
      _
    $region203: #{tpu_custom_call.1} parent=1 // pred_check_branch
      %449 = sbr.rel (0) target = $region205
    $region204: #{tpu_custom_call.1} parent=1 // pred_region
      %450 = dma.done [#allocation30], 256
    $region205: #{tpu_custom_call.1} parent=1 // pred_fallthru
      _
    // Predicated region
    $region206: #{tpu_custom_call.1} parent=1 // pred_check
      _
    $region207: #{tpu_custom_call.1} parent=1 // pred_check_branch
      %452 = sbr.rel (0) target = $region209
    $region208: #{tpu_custom_call.1} parent=1 // pred_region
      %453 = dma.done [#allocation30], 256
    $region209: #{tpu_custom_call.1} parent=1 // pred_fallthru
      _
    // Predicated region
    $region210: #{tpu_custom_call.1} parent=1 // pred_check
      _
    $region211: #{tpu_custom_call.1} parent=1 // pred_check_branch
      %455 = sbr.rel (0) target = $region213
    $region212: #{tpu_custom_call.1} parent=1 // pred_region
      %456 = dma.done [#allocation33], 256
    $region213: #{tpu_custom_call.1} parent=1 // pred_fallthru
      _
    // Predicated region
    $region214: #{tpu_custom_call.1} parent=1 // pred_check
      _
    $region215: #{tpu_custom_call.1} parent=1 // pred_check_branch
      %458 = sbr.rel (0) target = $region217
    $region216: #{tpu_custom_call.1} parent=1 // pred_region
      %459 = dma.done [#allocation33], 384
    $region217: #{tpu_custom_call.1} parent=1 // pred_fallthru
      _
    // Predicated region
    $region218: #{tpu_custom_call.1} parent=1 // pred_check
      _
    $region219: #{tpu_custom_call.1} parent=1 // pred_check_branch
      %461 = sbr.rel (0) target = $region221
    $region220: #{tpu_custom_call.1} parent=1 // pred_region
      %462 = dma.done [#allocation36], 384
    $region221: #{tpu_custom_call.1} parent=1 // pred_fallthru
      _
    // Predicated region
    $region222: #{tpu_custom_call.1} parent=1 // pred_check
      _
    $region223: #{tpu_custom_call.1} parent=1 // pred_check_branch
      %464 = sbr.rel (0) target = $region225
    $region224: #{tpu_custom_call.1} parent=1 // pred_region
      %465 = dma.done [#allocation36], 384
    $region225: #{tpu_custom_call.1} parent=1 // pred_fallthru
      _
    // Predicated region
    $region226: #{tpu_custom_call.1} parent=1 // pred_check
      _
    $region227: #{tpu_custom_call.1} parent=1 // pred_check_branch
      %467 = sbr.rel (0) target = $region229
    $region228: #{tpu_custom_call.1} parent=1 // pred_region
      %468 = dma.done [#allocation39], 384
    $region229: #{tpu_custom_call.1} parent=1 // pred_fallthru
      _
    // Predicated region
    $region230: #{tpu_custom_call.1} parent=1 // pred_check
      _
    $region231: #{tpu_custom_call.1} parent=1 // pred_check_branch
      %470 = sbr.rel (0) target = $region233
    $region232: #{tpu_custom_call.1} parent=1 // pred_region
      %471 = dma.done [#allocation39], 384
    $region233: #{tpu_custom_call.1} parent=1 // pred_fallthru
      _
    // Predicated region
    $region234: #{tpu_custom_call.1} parent=1 // pred_check
      _
    $region235: #{tpu_custom_call.1} parent=1 // pred_check_branch
      %473 = sbr.rel (0) target = $region237
    $region236: #{tpu_custom_call.1} parent=1 // pred_region
      %474 = dma.done [#allocation42], 384
    $region237: #{tpu_custom_call.1} parent=1 // pred_fallthru
      _
    // Predicated region
    $region238: #{tpu_custom_call.1} parent=1 // pred_check
      _
    $region239: #{tpu_custom_call.1} parent=1 // pred_check_branch
      %476 = sbr.rel (0) target = $region241
    $region240: #{tpu_custom_call.1} parent=1 // pred_region
      %477 = dma.done [#allocation42], 2048
    $region241: #{tpu_custom_call.1} parent=1 // pred_fallthru
      _
    %v478 = vld [vmem:[#allocation2] sm:$0x3]
    %v479 = vld [vmem:[%s31] sm:$0xff]
    %v480 = vld [vmem:[%s31 + $0x8] sm:$0xff]
    %v481 = vld [vmem:[#allocation5] sm:$0x3]
    %v482 = vld [vmem:[#allocation23] sm:$0xff]
    %v483 = vld [vmem:[#allocation23 + $0x8] sm:$0xff]
    %vm484 = vcmask 130048
    %v486 = vsel %vm484, %v481, 0
    %488 = vmatprep.subr.mxu0 0.0
    %489 = vmatpush1.msra.mxu0 0.0
    %490 = vmatprep.subr.mxu0 0.0
    %491 = vmatpush1.msra.mxu0 0.0
    %492 = vmatprep.subr.mxu0 0.0
    %493 = vmatpush1.msra.mxu0 0.0
    %494 = vmatprep.subr.mxu0 0.0
    %495 = vmatpush1.msra.mxu0 0.0
    %496 = vmatprep.subr.mxu0 0.0
    %497 = vmatpush1.msra.mxu0 0.0
    %498 = vmatprep.subr.mxu0 0.0
    %499 = vmatpush1.msra.mxu0 0.0
    %500 = vmatprep.subr.mxu0 0.0
    %501 = vmatpush1.msra.mxu0 0.0
    %502 = vmatprep.subr.mxu0 0.0
    %503 = vmatpush1.msra.mxu0 0.0
    %504 = vmatprep.subr.mxu0 0.0
    %505 = vmatpush1.msra.mxu0 0.0
    %506 = vmatprep.subr.mxu0 0.0
    %507 = vmatpush1.msra.mxu0 0.0
    %508 = vmatprep.subr.mxu0 0.0
    %509 = vmatpush1.msra.mxu0 0.0
    %510 = vmatprep.subr.mxu0 0.0
    %511 = vmatpush1.msra.mxu0 0.0
    %512 = vmatprep.subr.mxu0 0.0
    %513 = vmatpush1.msra.mxu0 0.0
    %514 = vmatprep.subr.mxu0 0.0
    %515 = vmatpush1.msra.mxu0 0.0
    %516 = vmatprep.subr.mxu0 0.0
    %517 = vmatpush1.msra.mxu0 %v483
    %518 = vmatprep.subr.mxu0 0.0
    %519 = vmatpush1.msra.mxu0 %v482
    %520 = vmatprep.subr.mxu0 0.0
    %521 = vmatpush2.msra.mxu0 0.0
    %522 = vmatprep.subr.mxu0 0.0
    %523 = vmatpush2.msra.mxu0 0.0
    %524 = vmatprep.subr.mxu0 0.0
    %525 = vmatpush2.msra.mxu0 0.0
    %526 = vmatprep.subr.mxu0 0.0
    %527 = vmatpush2.msra.mxu0 0.0
    %528 = vmatprep.subr.mxu0 0.0
    %529 = vmatpush2.msra.mxu0 0.0
    %530 = vmatprep.subr.mxu0 0.0
    %531 = vmatpush2.msra.mxu0 0.0
    %532 = vmatprep.subr.mxu0 0.0
    %533 = vmatpush2.msra.mxu0 0.0
    %534 = vmatprep.subr.mxu0 0.0
    %535 = vmatpush2.msra.mxu0 0.0
    %536 = vmatprep.subr.mxu0 0.0
    %537 = vmatpush2.msra.mxu0 0.0
    %538 = vmatprep.subr.mxu0 0.0
    %539 = vmatpush2.msra.mxu0 0.0
    %540 = vmatprep.subr.mxu0 0.0
    %541 = vmatpush2.msra.mxu0 0.0
    %542 = vmatprep.subr.mxu0 0.0
    %543 = vmatpush2.msra.mxu0 0.0
    %544 = vmatprep.subr.mxu0 0.0
    %545 = vmatpush2.msra.mxu0 0.0
    %546 = vmatprep.subr.mxu0 0.0
    %547 = vmatpush2.msra.mxu0 0.0
    %548 = vmatprep.subr.mxu0 0.0
    %549 = vmatpush2.msra.mxu0 0.0
    %550 = vmatprep.subr.mxu0 0.0
    %551 = vmatpush2.msra.mxu0 0.0
    %552 = vmatprep.mubr.f32.mxu0 0.0
    %553 = vmatmul.mubr.f32.gmra.mxu0 %v486
    %v554 = vpop.f32.mrf.mxu0
    %v555 = vadd.f32 0.0, %v554
    %v556 = vpop.f32.mrf.mxu0
    %557 = vdwg.mxu0
    %v559 = vsel %vm484, %v478, 0
    %561 = vmatprep.subr.mxu0 0.0
    %562 = vmatpush1.msra.mxu0 0.0
    %563 = vmatprep.subr.mxu0 0.0
    %564 = vmatpush1.msra.mxu0 0.0
    %565 = vmatprep.subr.mxu0 0.0
    %566 = vmatpush1.msra.mxu0 0.0
    %567 = vmatprep.subr.mxu0 0.0
    %568 = vmatpush1.msra.mxu0 0.0
    %569 = vmatprep.subr.mxu0 0.0
    %570 = vmatpush1.msra.mxu0 0.0
    %571 = vmatprep.subr.mxu0 0.0
    %572 = vmatpush1.msra.mxu0 0.0
    %573 = vmatprep.subr.mxu0 0.0
    %574 = vmatpush1.msra.mxu0 0.0
    %575 = vmatprep.subr.mxu0 0.0
    %576 = vmatpush1.msra.mxu0 0.0
    %577 = vmatprep.subr.mxu0 0.0
    %578 = vmatpush1.msra.mxu0 0.0
    %579 = vmatprep.subr.mxu0 0.0
    %580 = vmatpush1.msra.mxu0 0.0
    %581 = vmatprep.subr.mxu0 0.0
    %582 = vmatpush1.msra.mxu0 0.0
    %583 = vmatprep.subr.mxu0 0.0
    %584 = vmatpush1.msra.mxu0 0.0
    %585 = vmatprep.subr.mxu0 0.0
    %586 = vmatpush1.msra.mxu0 0.0
    %587 = vmatprep.subr.mxu0 0.0
    %588 = vmatpush1.msra.mxu0 0.0
    %589 = vmatprep.subr.mxu0 0.0
    %590 = vmatpush1.msra.mxu0 %v480
    %591 = vmatprep.subr.mxu0 0.0
    %592 = vmatpush1.msra.mxu0 %v479
    %593 = vmatprep.subr.mxu0 0.0
    %594 = vmatpush2.msra.mxu0 0.0
    %595 = vmatprep.subr.mxu0 0.0
    %596 = vmatpush2.msra.mxu0 0.0
    %597 = vmatprep.subr.mxu0 0.0
    %598 = vmatpush2.msra.mxu0 0.0
    %599 = vmatprep.subr.mxu0 0.0
    %600 = vmatpush2.msra.mxu0 0.0
    %601 = vmatprep.subr.mxu0 0.0
    %602 = vmatpush2.msra.mxu0 0.0
    %603 = vmatprep.subr.mxu0 0.0
    %604 = vmatpush2.msra.mxu0 0.0
    %605 = vmatprep.subr.mxu0 0.0
    %606 = vmatpush2.msra.mxu0 0.0
    %607 = vmatprep.subr.mxu0 0.0
    %608 = vmatpush2.msra.mxu0 0.0
    %609 = vmatprep.subr.mxu0 0.0
    %610 = vmatpush2.msra.mxu0 0.0
    %611 = vmatprep.subr.mxu0 0.0
    %612 = vmatpush2.msra.mxu0 0.0
    %613 = vmatprep.subr.mxu0 0.0
    %614 = vmatpush2.msra.mxu0 0.0
    %615 = vmatprep.subr.mxu0 0.0
    %616 = vmatpush2.msra.mxu0 0.0
    %617 = vmatprep.subr.mxu0 0.0
    %618 = vmatpush2.msra.mxu0 0.0
    %619 = vmatprep.subr.mxu0 0.0
    %620 = vmatpush2.msra.mxu0 0.0
    %621 = vmatprep.subr.mxu0 0.0
    %622 = vmatpush2.msra.mxu0 0.0
    %623 = vmatprep.subr.mxu0 0.0
    %624 = vmatpush2.msra.mxu0 0.0
    %625 = vmatprep.mubr.f32.mxu0 0.0
    %626 = vmatmul.mubr.f32.gmra.mxu0 %v559
    %v627 = vpop.f32.mrf.mxu0
    %v628 = vadd.f32 %v555, %v627
    %v629 = vpop.f32.mrf.mxu0
    %630 = vdwg.mxu0
    %v631 = vld [vmem:[%s5] sm:$0x3]
    %v632 = vld [vmem:[#allocation25] sm:$0xff]
    %v633 = vld [vmem:[#allocation25 + $0x8] sm:$0xff]
    %v635 = vsel %vm484, %v631, 0
    %637 = vmatprep.subr.mxu0 0.0
    %638 = vmatpush1.msra.mxu0 0.0
    %639 = vmatprep.subr.mxu0 0.0
    %640 = vmatpush1.msra.mxu0 0.0
    %641 = vmatprep.subr.mxu0 0.0
    %642 = vmatpush1.msra.mxu0 0.0
    %643 = vmatprep.subr.mxu0 0.0
    %644 = vmatpush1.msra.mxu0 0.0
    %645 = vmatprep.subr.mxu0 0.0
    %646 = vmatpush1.msra.mxu0 0.0
    %647 = vmatprep.subr.mxu0 0.0
    %648 = vmatpush1.msra.mxu0 0.0
    %649 = vmatprep.subr.mxu0 0.0
    %650 = vmatpush1.msra.mxu0 0.0
    %651 = vmatprep.subr.mxu0 0.0
    %652 = vmatpush1.msra.mxu0 0.0
    %653 = vmatprep.subr.mxu0 0.0
    %654 = vmatpush1.msra.mxu0 0.0
    %655 = vmatprep.subr.mxu0 0.0
    %656 = vmatpush1.msra.mxu0 0.0
    %657 = vmatprep.subr.mxu0 0.0
    %658 = vmatpush1.msra.mxu0 0.0
    %659 = vmatprep.subr.mxu0 0.0
    %660 = vmatpush1.msra.mxu0 0.0
    %661 = vmatprep.subr.mxu0 0.0
    %662 = vmatpush1.msra.mxu0 0.0
    %663 = vmatprep.subr.mxu0 0.0
    %664 = vmatpush1.msra.mxu0 0.0
    %665 = vmatprep.subr.mxu0 0.0
    %666 = vmatpush1.msra.mxu0 %v633
    %667 = vmatprep.subr.mxu0 0.0
    %668 = vmatpush1.msra.mxu0 %v632
    %669 = vmatprep.subr.mxu0 0.0
    %670 = vmatpush2.msra.mxu0 0.0
    %671 = vmatprep.subr.mxu0 0.0
    %672 = vmatpush2.msra.mxu0 0.0
    %673 = vmatprep.subr.mxu0 0.0
    %674 = vmatpush2.msra.mxu0 0.0
    %675 = vmatprep.subr.mxu0 0.0
    %676 = vmatpush2.msra.mxu0 0.0
    %677 = vmatprep.subr.mxu0 0.0
    %678 = vmatpush2.msra.mxu0 0.0
    %679 = vmatprep.subr.mxu0 0.0
    %680 = vmatpush2.msra.mxu0 0.0
    %681 = vmatprep.subr.mxu0 0.0
    %682 = vmatpush2.msra.mxu0 0.0
    %683 = vmatprep.subr.mxu0 0.0
    %684 = vmatpush2.msra.mxu0 0.0
    %685 = vmatprep.subr.mxu0 0.0
    %686 = vmatpush2.msra.mxu0 0.0
    %687 = vmatprep.subr.mxu0 0.0
    %688 = vmatpush2.msra.mxu0 0.0
    %689 = vmatprep.subr.mxu0 0.0
    %690 = vmatpush2.msra.mxu0 0.0
    %691 = vmatprep.subr.mxu0 0.0
    %692 = vmatpush2.msra.mxu0 0.0
    %693 = vmatprep.subr.mxu0 0.0
    %694 = vmatpush2.msra.mxu0 0.0
    %695 = vmatprep.subr.mxu0 0.0
    %696 = vmatpush2.msra.mxu0 0.0
    %697 = vmatprep.subr.mxu0 0.0
    %698 = vmatpush2.msra.mxu0 0.0
    %699 = vmatprep.subr.mxu0 0.0
    %700 = vmatpush2.msra.mxu0 0.0
    %701 = vmatprep.mubr.f32.mxu0 0.0
    %702 = vmatmul.mubr.f32.gmra.mxu0 %v635
    %v703 = vpop.f32.mrf.mxu0
    %v704 = vadd.f32 0.0, %v703
    %v705 = vpop.f32.mrf.mxu0
    %706 = vdwg.mxu0
    %v707 = vadd.f32 %v628, %v704
    %v708 = vld [vmem:[%s7] sm:$0x3]
    %v709 = vld [vmem:[#allocation26] sm:$0xff]
    %v710 = vld [vmem:[#allocation26 + $0x8] sm:$0xff]
    %v712 = vsel %vm484, %v708, 0
    %714 = vmatprep.subr.mxu0 0.0
    %715 = vmatpush1.msra.mxu0 0.0
    %716 = vmatprep.subr.mxu0 0.0
    %717 = vmatpush1.msra.mxu0 0.0
    %718 = vmatprep.subr.mxu0 0.0
    %719 = vmatpush1.msra.mxu0 0.0
    %720 = vmatprep.subr.mxu0 0.0
    %721 = vmatpush1.msra.mxu0 0.0
    %722 = vmatprep.subr.mxu0 0.0
    %723 = vmatpush1.msra.mxu0 0.0
    %724 = vmatprep.subr.mxu0 0.0
    %725 = vmatpush1.msra.mxu0 0.0
    %726 = vmatprep.subr.mxu0 0.0
    %727 = vmatpush1.msra.mxu0 0.0
    %728 = vmatprep.subr.mxu0 0.0
    %729 = vmatpush1.msra.mxu0 0.0
    %730 = vmatprep.subr.mxu0 0.0
    %731 = vmatpush1.msra.mxu0 0.0
    %732 = vmatprep.subr.mxu0 0.0
    %733 = vmatpush1.msra.mxu0 0.0
    %734 = vmatprep.subr.mxu0 0.0
    %735 = vmatpush1.msra.mxu0 0.0
    %736 = vmatprep.subr.mxu0 0.0
    %737 = vmatpush1.msra.mxu0 0.0
    %738 = vmatprep.subr.mxu0 0.0
    %739 = vmatpush1.msra.mxu0 0.0
    %740 = vmatprep.subr.mxu0 0.0
    %741 = vmatpush1.msra.mxu0 0.0
    %742 = vmatprep.subr.mxu0 0.0
    %743 = vmatpush1.msra.mxu0 %v710
    %744 = vmatprep.subr.mxu0 0.0
    %745 = vmatpush1.msra.mxu0 %v709
    %746 = vmatprep.subr.mxu0 0.0
    %747 = vmatpush2.msra.mxu0 0.0
    %748 = vmatprep.subr.mxu0 0.0
    %749 = vmatpush2.msra.mxu0 0.0
    %750 = vmatprep.subr.mxu0 0.0
    %751 = vmatpush2.msra.mxu0 0.0
    %752 = vmatprep.subr.mxu0 0.0
    %753 = vmatpush2.msra.mxu0 0.0
    %754 = vmatprep.subr.mxu0 0.0
    %755 = vmatpush2.msra.mxu0 0.0
    %756 = vmatprep.subr.mxu0 0.0
    %757 = vmatpush2.msra.mxu0 0.0
    %758 = vmatprep.subr.mxu0 0.0
    %759 = vmatpush2.msra.mxu0 0.0
    %760 = vmatprep.subr.mxu0 0.0
    %761 = vmatpush2.msra.mxu0 0.0
    %762 = vmatprep.subr.mxu0 0.0
    %763 = vmatpush2.msra.mxu0 0.0
    %764 = vmatprep.subr.mxu0 0.0
    %765 = vmatpush2.msra.mxu0 0.0
    %766 = vmatprep.subr.mxu0 0.0
    %767 = vmatpush2.msra.mxu0 0.0
    %768 = vmatprep.subr.mxu0 0.0
    %769 = vmatpush2.msra.mxu0 0.0
    %770 = vmatprep.subr.mxu0 0.0
    %771 = vmatpush2.msra.mxu0 0.0
    %772 = vmatprep.subr.mxu0 0.0
    %773 = vmatpush2.msra.mxu0 0.0
    %774 = vmatprep.subr.mxu0 0.0
    %775 = vmatpush2.msra.mxu0 0.0
    %776 = vmatprep.subr.mxu0 0.0
    %777 = vmatpush2.msra.mxu0 0.0
    %778 = vmatprep.mubr.f32.mxu0 0.0
    %779 = vmatmul.mubr.f32.gmra.mxu0 %v712
    %v780 = vpop.f32.mrf.mxu0
    %v781 = vadd.f32 0.0, %v780
    %v782 = vpop.f32.mrf.mxu0
    %783 = vdwg.mxu0
    %v784 = vadd.f32 %v707, %v781
    %v785 = vld [vmem:[#allocation7] sm:$0x3]
    %v786 = vld [vmem:[#allocation28] sm:$0xff]
    %v787 = vld [vmem:[#allocation28 + $0x8] sm:$0xf]
    %vm788 = vcmask 97280
    %v790 = vsel %vm788, %v785, 0
    %vm792 = vcmask 1043456
    %v794 = vsel %vm792, %v787, 0
    %796 = vmatprep.subr.mxu0 0.0
    %797 = vmatpush1.msra.mxu0 0.0
    %798 = vmatprep.subr.mxu0 0.0
    %799 = vmatpush1.msra.mxu0 0.0
    %800 = vmatprep.subr.mxu0 0.0
    %801 = vmatpush1.msra.mxu0 0.0
    %802 = vmatprep.subr.mxu0 0.0
    %803 = vmatpush1.msra.mxu0 0.0
    %804 = vmatprep.subr.mxu0 0.0
    %805 = vmatpush1.msra.mxu0 0.0
    %806 = vmatprep.subr.mxu0 0.0
    %807 = vmatpush1.msra.mxu0 0.0
    %808 = vmatprep.subr.mxu0 0.0
    %809 = vmatpush1.msra.mxu0 0.0
    %810 = vmatprep.subr.mxu0 0.0
    %811 = vmatpush1.msra.mxu0 0.0
    %812 = vmatprep.subr.mxu0 0.0
    %813 = vmatpush1.msra.mxu0 0.0
    %814 = vmatprep.subr.mxu0 0.0
    %815 = vmatpush1.msra.mxu0 0.0
    %816 = vmatprep.subr.mxu0 0.0
    %817 = vmatpush1.msra.mxu0 0.0
    %818 = vmatprep.subr.mxu0 0.0
    %819 = vmatpush1.msra.mxu0 0.0
    %820 = vmatprep.subr.mxu0 0.0
    %821 = vmatpush1.msra.mxu0 0.0
    %822 = vmatprep.subr.mxu0 0.0
    %823 = vmatpush1.msra.mxu0 0.0
    %824 = vmatprep.subr.mxu0 0.0
    %825 = vmatpush1.msra.mxu0 %v794
    %826 = vmatprep.subr.mxu0 0.0
    %827 = vmatpush1.msra.mxu0 %v786
    %828 = vmatprep.subr.mxu0 0.0
    %829 = vmatpush2.msra.mxu0 0.0
    %830 = vmatprep.subr.mxu0 0.0
    %831 = vmatpush2.msra.mxu0 0.0
    %832 = vmatprep.subr.mxu0 0.0
    %833 = vmatpush2.msra.mxu0 0.0
    %834 = vmatprep.subr.mxu0 0.0
    %835 = vmatpush2.msra.mxu0 0.0
    %836 = vmatprep.subr.mxu0 0.0
    %837 = vmatpush2.msra.mxu0 0.0
    %838 = vmatprep.subr.mxu0 0.0
    %839 = vmatpush2.msra.mxu0 0.0
    %840 = vmatprep.subr.mxu0 0.0
    %841 = vmatpush2.msra.mxu0 0.0
    %842 = vmatprep.subr.mxu0 0.0
    %843 = vmatpush2.msra.mxu0 0.0
    %844 = vmatprep.subr.mxu0 0.0
    %845 = vmatpush2.msra.mxu0 0.0
    %846 = vmatprep.subr.mxu0 0.0
    %847 = vmatpush2.msra.mxu0 0.0
    %848 = vmatprep.subr.mxu0 0.0
    %849 = vmatpush2.msra.mxu0 0.0
    %850 = vmatprep.subr.mxu0 0.0
    %851 = vmatpush2.msra.mxu0 0.0
    %852 = vmatprep.subr.mxu0 0.0
    %853 = vmatpush2.msra.mxu0 0.0
    %854 = vmatprep.subr.mxu0 0.0
    %855 = vmatpush2.msra.mxu0 0.0
    %856 = vmatprep.subr.mxu0 0.0
    %857 = vmatpush2.msra.mxu0 0.0
    %858 = vmatprep.subr.mxu0 0.0
    %859 = vmatpush2.msra.mxu0 0.0
    %860 = vmatprep.mubr.f32.mxu0 0.0
    %861 = vmatmul.mubr.f32.gmra.mxu0 %v790
    %v862 = vpop.f32.mrf.mxu0
    %v863 = vadd.f32 0.0, %v862
    %v864 = vpop.f32.mrf.mxu0
    %865 = vdwg.mxu0
    %v866 = vadd.f32 %v784, %v863
    %v867 = vld [vmem:[#allocation8] sm:$0x3]
    %v868 = vld [vmem:[#allocation29] sm:$0xff]
    %v869 = vld [vmem:[#allocation29 + $0x8] sm:$0xf]
    %v871 = vsel %vm788, %v867, 0
    %v874 = vsel %vm792, %v869, 0
    %876 = vmatprep.subr.mxu0 0.0
    %877 = vmatpush1.msra.mxu0 0.0
    %878 = vmatprep.subr.mxu0 0.0
    %879 = vmatpush1.msra.mxu0 0.0
    %880 = vmatprep.subr.mxu0 0.0
    %881 = vmatpush1.msra.mxu0 0.0
    %882 = vmatprep.subr.mxu0 0.0
    %883 = vmatpush1.msra.mxu0 0.0
    %884 = vmatprep.subr.mxu0 0.0
    %885 = vmatpush1.msra.mxu0 0.0
    %886 = vmatprep.subr.mxu0 0.0
    %887 = vmatpush1.msra.mxu0 0.0
    %888 = vmatprep.subr.mxu0 0.0
    %889 = vmatpush1.msra.mxu0 0.0
    %890 = vmatprep.subr.mxu0 0.0
    %891 = vmatpush1.msra.mxu0 0.0
    %892 = vmatprep.subr.mxu0 0.0
    %893 = vmatpush1.msra.mxu0 0.0
    %894 = vmatprep.subr.mxu0 0.0
    %895 = vmatpush1.msra.mxu0 0.0
    %896 = vmatprep.subr.mxu0 0.0
    %897 = vmatpush1.msra.mxu0 0.0
    %898 = vmatprep.subr.mxu0 0.0
    %899 = vmatpush1.msra.mxu0 0.0
    %900 = vmatprep.subr.mxu0 0.0
    %901 = vmatpush1.msra.mxu0 0.0
    %902 = vmatprep.subr.mxu0 0.0
    %903 = vmatpush1.msra.mxu0 0.0
    %904 = vmatprep.subr.mxu0 0.0
    %905 = vmatpush1.msra.mxu0 %v874
    %906 = vmatprep.subr.mxu0 0.0
    %907 = vmatpush1.msra.mxu0 %v868
    %908 = vmatprep.subr.mxu0 0.0
    %909 = vmatpush2.msra.mxu0 0.0
    %910 = vmatprep.subr.mxu0 0.0
    %911 = vmatpush2.msra.mxu0 0.0
    %912 = vmatprep.subr.mxu0 0.0
    %913 = vmatpush2.msra.mxu0 0.0
    %914 = vmatprep.subr.mxu0 0.0
    %915 = vmatpush2.msra.mxu0 0.0
    %916 = vmatprep.subr.mxu0 0.0
    %917 = vmatpush2.msra.mxu0 0.0
    %918 = vmatprep.subr.mxu0 0.0
    %919 = vmatpush2.msra.mxu0 0.0
    %920 = vmatprep.subr.mxu0 0.0
    %921 = vmatpush2.msra.mxu0 0.0
    %922 = vmatprep.subr.mxu0 0.0
    %923 = vmatpush2.msra.mxu0 0.0
    %924 = vmatprep.subr.mxu0 0.0
    %925 = vmatpush2.msra.mxu0 0.0
    %926 = vmatprep.subr.mxu0 0.0
    %927 = vmatpush2.msra.mxu0 0.0
    %928 = vmatprep.subr.mxu0 0.0
    %929 = vmatpush2.msra.mxu0 0.0
    %930 = vmatprep.subr.mxu0 0.0
    %931 = vmatpush2.msra.mxu0 0.0
    %932 = vmatprep.subr.mxu0 0.0
    %933 = vmatpush2.msra.mxu0 0.0
    %934 = vmatprep.subr.mxu0 0.0
    %935 = vmatpush2.msra.mxu0 0.0
    %936 = vmatprep.subr.mxu0 0.0
    %937 = vmatpush2.msra.mxu0 0.0
    %938 = vmatprep.subr.mxu0 0.0
    %939 = vmatpush2.msra.mxu0 0.0
    %940 = vmatprep.mubr.f32.mxu0 0.0
    %941 = vmatmul.mubr.f32.gmra.mxu0 %v871
    %v942 = vpop.f32.mrf.mxu0
    %v943 = vadd.f32 0.0, %v942
    %v944 = vpop.f32.mrf.mxu0
    %945 = vdwg.mxu0
    %v946 = vadd.f32 %v866, %v943
    %v947 = vld [vmem:[#allocation10] sm:$0x3]
    %v948 = vld [vmem:[#allocation31] sm:$0xff]
    %v949 = vld [vmem:[#allocation31 + $0x8] sm:$0xf]
    %v951 = vsel %vm788, %v947, 0
    %v954 = vsel %vm792, %v949, 0
    %956 = vmatprep.subr.mxu0 0.0
    %957 = vmatpush1.msra.mxu0 0.0
    %958 = vmatprep.subr.mxu0 0.0
    %959 = vmatpush1.msra.mxu0 0.0
    %960 = vmatprep.subr.mxu0 0.0
    %961 = vmatpush1.msra.mxu0 0.0
    %962 = vmatprep.subr.mxu0 0.0
    %963 = vmatpush1.msra.mxu0 0.0
    %964 = vmatprep.subr.mxu0 0.0
    %965 = vmatpush1.msra.mxu0 0.0
    %966 = vmatprep.subr.mxu0 0.0
    %967 = vmatpush1.msra.mxu0 0.0
    %968 = vmatprep.subr.mxu0 0.0
    %969 = vmatpush1.msra.mxu0 0.0
    %970 = vmatprep.subr.mxu0 0.0
    %971 = vmatpush1.msra.mxu0 0.0
    %972 = vmatprep.subr.mxu0 0.0
    %973 = vmatpush1.msra.mxu0 0.0
    %974 = vmatprep.subr.mxu0 0.0
    %975 = vmatpush1.msra.mxu0 0.0
    %976 = vmatprep.subr.mxu0 0.0
    %977 = vmatpush1.msra.mxu0 0.0
    %978 = vmatprep.subr.mxu0 0.0
    %979 = vmatpush1.msra.mxu0 0.0
    %980 = vmatprep.subr.mxu0 0.0
    %981 = vmatpush1.msra.mxu0 0.0
    %982 = vmatprep.subr.mxu0 0.0
    %983 = vmatpush1.msra.mxu0 0.0
    %984 = vmatprep.subr.mxu0 0.0
    %985 = vmatpush1.msra.mxu0 %v954
    %986 = vmatprep.subr.mxu0 0.0
    %987 = vmatpush1.msra.mxu0 %v948
    %988 = vmatprep.subr.mxu0 0.0
    %989 = vmatpush2.msra.mxu0 0.0
    %990 = vmatprep.subr.mxu0 0.0
    %991 = vmatpush2.msra.mxu0 0.0
    %992 = vmatprep.subr.mxu0 0.0
    %993 = vmatpush2.msra.mxu0 0.0
    %994 = vmatprep.subr.mxu0 0.0
    %995 = vmatpush2.msra.mxu0 0.0
    %996 = vmatprep.subr.mxu0 0.0
    %997 = vmatpush2.msra.mxu0 0.0
    %998 = vmatprep.subr.mxu0 0.0
    %999 = vmatpush2.msra.mxu0 0.0
    %1000 = vmatprep.subr.mxu0 0.0
    %1001 = vmatpush2.msra.mxu0 0.0
    %1002 = vmatprep.subr.mxu0 0.0
    %1003 = vmatpush2.msra.mxu0 0.0
    %1004 = vmatprep.subr.mxu0 0.0
    %1005 = vmatpush2.msra.mxu0 0.0
    %1006 = vmatprep.subr.mxu0 0.0
    %1007 = vmatpush2.msra.mxu0 0.0
    %1008 = vmatprep.subr.mxu0 0.0
    %1009 = vmatpush2.msra.mxu0 0.0
    %1010 = vmatprep.subr.mxu0 0.0
    %1011 = vmatpush2.msra.mxu0 0.0
    %1012 = vmatprep.subr.mxu0 0.0
    %1013 = vmatpush2.msra.mxu0 0.0
    %1014 = vmatprep.subr.mxu0 0.0
    %1015 = vmatpush2.msra.mxu0 0.0
    %1016 = vmatprep.subr.mxu0 0.0
    %1017 = vmatpush2.msra.mxu0 0.0
    %1018 = vmatprep.subr.mxu0 0.0
    %1019 = vmatpush2.msra.mxu0 0.0
    %1020 = vmatprep.mubr.f32.mxu0 0.0
    %1021 = vmatmul.mubr.f32.gmra.mxu0 %v951
    %v1022 = vpop.f32.mrf.mxu0
    %v1023 = vadd.f32 0.0, %v1022
    %v1024 = vpop.f32.mrf.mxu0
    %1025 = vdwg.mxu0
    %v1026 = vadd.f32 %v946, %v1023
    %v1027 = vld [vmem:[#allocation11] sm:$0x3]
    %v1028 = vld [vmem:[#allocation32] sm:$0xff]
    %v1029 = vld [vmem:[#allocation32 + $0x8] sm:$0xf]
    %v1031 = vsel %vm788, %v1027, 0
    %v1034 = vsel %vm792, %v1029, 0
    %1036 = vmatprep.subr.mxu0 0.0
    %1037 = vmatpush1.msra.mxu0 0.0
    %1038 = vmatprep.subr.mxu0 0.0
    %1039 = vmatpush1.msra.mxu0 0.0
    %1040 = vmatprep.subr.mxu0 0.0
    %1041 = vmatpush1.msra.mxu0 0.0
    %1042 = vmatprep.subr.mxu0 0.0
    %1043 = vmatpush1.msra.mxu0 0.0
    %1044 = vmatprep.subr.mxu0 0.0
    %1045 = vmatpush1.msra.mxu0 0.0
    %1046 = vmatprep.subr.mxu0 0.0
    %1047 = vmatpush1.msra.mxu0 0.0
    %1048 = vmatprep.subr.mxu0 0.0
    %1049 = vmatpush1.msra.mxu0 0.0
    %1050 = vmatprep.subr.mxu0 0.0
    %1051 = vmatpush1.msra.mxu0 0.0
    %1052 = vmatprep.subr.mxu0 0.0
    %1053 = vmatpush1.msra.mxu0 0.0
    %1054 = vmatprep.subr.mxu0 0.0
    %1055 = vmatpush1.msra.mxu0 0.0
    %1056 = vmatprep.subr.mxu0 0.0
    %1057 = vmatpush1.msra.mxu0 0.0
    %1058 = vmatprep.subr.mxu0 0.0
    %1059 = vmatpush1.msra.mxu0 0.0
    %1060 = vmatprep.subr.mxu0 0.0
    %1061 = vmatpush1.msra.mxu0 0.0
    %1062 = vmatprep.subr.mxu0 0.0
    %1063 = vmatpush1.msra.mxu0 0.0
    %1064 = vmatprep.subr.mxu0 0.0
    %1065 = vmatpush1.msra.mxu0 %v1034
    %1066 = vmatprep.subr.mxu0 0.0
    %1067 = vmatpush1.msra.mxu0 %v1028
    %1068 = vmatprep.subr.mxu0 0.0
    %1069 = vmatpush2.msra.mxu0 0.0
    %1070 = vmatprep.subr.mxu0 0.0
    %1071 = vmatpush2.msra.mxu0 0.0
    %1072 = vmatprep.subr.mxu0 0.0
    %1073 = vmatpush2.msra.mxu0 0.0
    %1074 = vmatprep.subr.mxu0 0.0
    %1075 = vmatpush2.msra.mxu0 0.0
    %1076 = vmatprep.subr.mxu0 0.0
    %1077 = vmatpush2.msra.mxu0 0.0
    %1078 = vmatprep.subr.mxu0 0.0
    %1079 = vmatpush2.msra.mxu0 0.0
    %1080 = vmatprep.subr.mxu0 0.0
    %1081 = vmatpush2.msra.mxu0 0.0
    %1082 = vmatprep.subr.mxu0 0.0
    %1083 = vmatpush2.msra.mxu0 0.0
    %1084 = vmatprep.subr.mxu0 0.0
    %1085 = vmatpush2.msra.mxu0 0.0
    %1086 = vmatprep.subr.mxu0 0.0
    %1087 = vmatpush2.msra.mxu0 0.0
    %1088 = vmatprep.subr.mxu0 0.0
    %1089 = vmatpush2.msra.mxu0 0.0
    %1090 = vmatprep.subr.mxu0 0.0
    %1091 = vmatpush2.msra.mxu0 0.0
    %1092 = vmatprep.subr.mxu0 0.0
    %1093 = vmatpush2.msra.mxu0 0.0
    %1094 = vmatprep.subr.mxu0 0.0
    %1095 = vmatpush2.msra.mxu0 0.0
    %1096 = vmatprep.subr.mxu0 0.0
    %1097 = vmatpush2.msra.mxu0 0.0
    %1098 = vmatprep.subr.mxu0 0.0
    %1099 = vmatpush2.msra.mxu0 0.0
    %1100 = vmatprep.mubr.f32.mxu0 0.0
    %1101 = vmatmul.mubr.f32.gmra.mxu0 %v1031
    %v1102 = vpop.f32.mrf.mxu0
    %v1103 = vadd.f32 0.0, %v1102
    %v1104 = vpop.f32.mrf.mxu0
    %1105 = vdwg.mxu0
    %v1106 = vadd.f32 %v1026, %v1103
    %v1107 = vld [vmem:[#allocation13] sm:$0x3]
    %v1108 = vld [vmem:[#allocation34] sm:$0xff]
    %v1109 = vld [vmem:[#allocation34 + $0x8] sm:$0xff]
    %v1110 = vld [vmem:[#allocation34 + $0x10] sm:$0xf]
    %vm1111 = vcmask 162816
    %v1113 = vsel %vm1111, %v1107, 0
    %v1116 = vsel %vm792, %v1110, 0
    %1118 = vmatprep.subr.mxu0 0.0
    %1119 = vmatpush1.msra.mxu0 0.0
    %1120 = vmatprep.subr.mxu0 0.0
    %1121 = vmatpush1.msra.mxu0 0.0
    %1122 = vmatprep.subr.mxu0 0.0
    %1123 = vmatpush1.msra.mxu0 0.0
    %1124 = vmatprep.subr.mxu0 0.0
    %1125 = vmatpush1.msra.mxu0 0.0
    %1126 = vmatprep.subr.mxu0 0.0
    %1127 = vmatpush1.msra.mxu0 0.0
    %1128 = vmatprep.subr.mxu0 0.0
    %1129 = vmatpush1.msra.mxu0 0.0
    %1130 = vmatprep.subr.mxu0 0.0
    %1131 = vmatpush1.msra.mxu0 0.0
    %1132 = vmatprep.subr.mxu0 0.0
    %1133 = vmatpush1.msra.mxu0 0.0
    %1134 = vmatprep.subr.mxu0 0.0
    %1135 = vmatpush1.msra.mxu0 0.0
    %1136 = vmatprep.subr.mxu0 0.0
    %1137 = vmatpush1.msra.mxu0 0.0
    %1138 = vmatprep.subr.mxu0 0.0
    %1139 = vmatpush1.msra.mxu0 0.0
    %1140 = vmatprep.subr.mxu0 0.0
    %1141 = vmatpush1.msra.mxu0 0.0
    %1142 = vmatprep.subr.mxu0 0.0
    %1143 = vmatpush1.msra.mxu0 0.0
    %1144 = vmatprep.subr.mxu0 0.0
    %1145 = vmatpush1.msra.mxu0 %v1116
    %1146 = vmatprep.subr.mxu0 0.0
    %1147 = vmatpush1.msra.mxu0 %v1109
    %1148 = vmatprep.subr.mxu0 0.0
    %1149 = vmatpush1.msra.mxu0 %v1108
    %1150 = vmatprep.subr.mxu0 0.0
    %1151 = vmatpush2.msra.mxu0 0.0
    %1152 = vmatprep.subr.mxu0 0.0
    %1153 = vmatpush2.msra.mxu0 0.0
    %1154 = vmatprep.subr.mxu0 0.0
    %1155 = vmatpush2.msra.mxu0 0.0
    %1156 = vmatprep.subr.mxu0 0.0
    %1157 = vmatpush2.msra.mxu0 0.0
    %1158 = vmatprep.subr.mxu0 0.0
    %1159 = vmatpush2.msra.mxu0 0.0
    %1160 = vmatprep.subr.mxu0 0.0
    %1161 = vmatpush2.msra.mxu0 0.0
    %1162 = vmatprep.subr.mxu0 0.0
    %1163 = vmatpush2.msra.mxu0 0.0
    %1164 = vmatprep.subr.mxu0 0.0
    %1165 = vmatpush2.msra.mxu0 0.0
    %1166 = vmatprep.subr.mxu0 0.0
    %1167 = vmatpush2.msra.mxu0 0.0
    %1168 = vmatprep.subr.mxu0 0.0
    %1169 = vmatpush2.msra.mxu0 0.0
    %1170 = vmatprep.subr.mxu0 0.0
    %1171 = vmatpush2.msra.mxu0 0.0
    %1172 = vmatprep.subr.mxu0 0.0
    %1173 = vmatpush2.msra.mxu0 0.0
    %1174 = vmatprep.subr.mxu0 0.0
    %1175 = vmatpush2.msra.mxu0 0.0
    %1176 = vmatprep.subr.mxu0 0.0
    %1177 = vmatpush2.msra.mxu0 0.0
    %1178 = vmatprep.subr.mxu0 0.0
    %1179 = vmatpush2.msra.mxu0 0.0
    %1180 = vmatprep.subr.mxu0 0.0
    %1181 = vmatpush2.msra.mxu0 0.0
    %1182 = vmatprep.mubr.f32.mxu0 0.0
    %1183 = vmatmul.mubr.f32.gmra.mxu0 %v1113
    %v1184 = vpop.f32.mrf.mxu0
    %v1185 = vadd.f32 0.0, %v1184
    %v1186 = vpop.f32.mrf.mxu0
    %1187 = vdwg.mxu0
    %v1188 = vadd.f32 %v1106, %v1185
    %v1189 = vld [vmem:[#allocation14] sm:$0x3]
    %v1190 = vld [vmem:[#allocation35] sm:$0xff]
    %v1191 = vld [vmem:[#allocation35 + $0x8] sm:$0xff]
    %v1192 = vld [vmem:[#allocation35 + $0x10] sm:$0xf]
    %v1194 = vsel %vm1111, %v1189, 0
    %v1197 = vsel %vm792, %v1192, 0
    %1199 = vmatprep.subr.mxu0 0.0
    %1200 = vmatpush1.msra.mxu0 0.0
    %1201 = vmatprep.subr.mxu0 0.0
    %1202 = vmatpush1.msra.mxu0 0.0
    %1203 = vmatprep.subr.mxu0 0.0
    %1204 = vmatpush1.msra.mxu0 0.0
    %1205 = vmatprep.subr.mxu0 0.0
    %1206 = vmatpush1.msra.mxu0 0.0
    %1207 = vmatprep.subr.mxu0 0.0
    %1208 = vmatpush1.msra.mxu0 0.0
    %1209 = vmatprep.subr.mxu0 0.0
    %1210 = vmatpush1.msra.mxu0 0.0
    %1211 = vmatprep.subr.mxu0 0.0
    %1212 = vmatpush1.msra.mxu0 0.0
    %1213 = vmatprep.subr.mxu0 0.0
    %1214 = vmatpush1.msra.mxu0 0.0
    %1215 = vmatprep.subr.mxu0 0.0
    %1216 = vmatpush1.msra.mxu0 0.0
    %1217 = vmatprep.subr.mxu0 0.0
    %1218 = vmatpush1.msra.mxu0 0.0
    %1219 = vmatprep.subr.mxu0 0.0
    %1220 = vmatpush1.msra.mxu0 0.0
    %1221 = vmatprep.subr.mxu0 0.0
    %1222 = vmatpush1.msra.mxu0 0.0
    %1223 = vmatprep.subr.mxu0 0.0
    %1224 = vmatpush1.msra.mxu0 0.0
    %1225 = vmatprep.subr.mxu0 0.0
    %1226 = vmatpush1.msra.mxu0 %v1197
    %1227 = vmatprep.subr.mxu0 0.0
    %1228 = vmatpush1.msra.mxu0 %v1191
    %1229 = vmatprep.subr.mxu0 0.0
    %1230 = vmatpush1.msra.mxu0 %v1190
    %1231 = vmatprep.subr.mxu0 0.0
    %1232 = vmatpush2.msra.mxu0 0.0
    %1233 = vmatprep.subr.mxu0 0.0
    %1234 = vmatpush2.msra.mxu0 0.0
    %1235 = vmatprep.subr.mxu0 0.0
    %1236 = vmatpush2.msra.mxu0 0.0
    %1237 = vmatprep.subr.mxu0 0.0
    %1238 = vmatpush2.msra.mxu0 0.0
    %1239 = vmatprep.subr.mxu0 0.0
    %1240 = vmatpush2.msra.mxu0 0.0
    %1241 = vmatprep.subr.mxu0 0.0
    %1242 = vmatpush2.msra.mxu0 0.0
    %1243 = vmatprep.subr.mxu0 0.0
    %1244 = vmatpush2.msra.mxu0 0.0
    %1245 = vmatprep.subr.mxu0 0.0
    %1246 = vmatpush2.msra.mxu0 0.0
    %1247 = vmatprep.subr.mxu0 0.0
    %1248 = vmatpush2.msra.mxu0 0.0
    %1249 = vmatprep.subr.mxu0 0.0
    %1250 = vmatpush2.msra.mxu0 0.0
    %1251 = vmatprep.subr.mxu0 0.0
    %1252 = vmatpush2.msra.mxu0 0.0
    %1253 = vmatprep.subr.mxu0 0.0
    %1254 = vmatpush2.msra.mxu0 0.0
    %1255 = vmatprep.subr.mxu0 0.0
    %1256 = vmatpush2.msra.mxu0 0.0
    %1257 = vmatprep.subr.mxu0 0.0
    %1258 = vmatpush2.msra.mxu0 0.0
    %1259 = vmatprep.subr.mxu0 0.0
    %1260 = vmatpush2.msra.mxu0 0.0
    %1261 = vmatprep.subr.mxu0 0.0
    %1262 = vmatpush2.msra.mxu0 0.0
    %1263 = vmatprep.mubr.f32.mxu0 0.0
    %1264 = vmatmul.mubr.f32.gmra.mxu0 %v1194
    %v1265 = vpop.f32.mrf.mxu0
    %v1266 = vadd.f32 0.0, %v1265
    %v1267 = vpop.f32.mrf.mxu0
    %1268 = vdwg.mxu0
    %v1269 = vadd.f32 %v1188, %v1266
    %v1270 = vld [vmem:[#allocation16] sm:$0x3]
    %v1271 = vld [vmem:[#allocation37] sm:$0xff]
    %v1272 = vld [vmem:[#allocation37 + $0x8] sm:$0xff]
    %v1273 = vld [vmem:[#allocation37 + $0x10] sm:$0xf]
    %v1275 = vsel %vm1111, %v1270, 0
    %v1278 = vsel %vm792, %v1273, 0
    %1280 = vmatprep.subr.mxu0 0.0
    %1281 = vmatpush1.msra.mxu0 0.0
    %1282 = vmatprep.subr.mxu0 0.0
    %1283 = vmatpush1.msra.mxu0 0.0
    %1284 = vmatprep.subr.mxu0 0.0
    %1285 = vmatpush1.msra.mxu0 0.0
    %1286 = vmatprep.subr.mxu0 0.0
    %1287 = vmatpush1.msra.mxu0 0.0
    %1288 = vmatprep.subr.mxu0 0.0
    %1289 = vmatpush1.msra.mxu0 0.0
    %1290 = vmatprep.subr.mxu0 0.0
    %1291 = vmatpush1.msra.mxu0 0.0
    %1292 = vmatprep.subr.mxu0 0.0
    %1293 = vmatpush1.msra.mxu0 0.0
    %1294 = vmatprep.subr.mxu0 0.0
    %1295 = vmatpush1.msra.mxu0 0.0
    %1296 = vmatprep.subr.mxu0 0.0
    %1297 = vmatpush1.msra.mxu0 0.0
    %1298 = vmatprep.subr.mxu0 0.0
    %1299 = vmatpush1.msra.mxu0 0.0
    %1300 = vmatprep.subr.mxu0 0.0
    %1301 = vmatpush1.msra.mxu0 0.0
    %1302 = vmatprep.subr.mxu0 0.0
    %1303 = vmatpush1.msra.mxu0 0.0
    %1304 = vmatprep.subr.mxu0 0.0
    %1305 = vmatpush1.msra.mxu0 0.0
    %1306 = vmatprep.subr.mxu0 0.0
    %1307 = vmatpush1.msra.mxu0 %v1278
    %1308 = vmatprep.subr.mxu0 0.0
    %1309 = vmatpush1.msra.mxu0 %v1272
    %1310 = vmatprep.subr.mxu0 0.0
    %1311 = vmatpush1.msra.mxu0 %v1271
    %1312 = vmatprep.subr.mxu0 0.0
    %1313 = vmatpush2.msra.mxu0 0.0
    %1314 = vmatprep.subr.mxu0 0.0
    %1315 = vmatpush2.msra.mxu0 0.0
    %1316 = vmatprep.subr.mxu0 0.0
    %1317 = vmatpush2.msra.mxu0 0.0
    %1318 = vmatprep.subr.mxu0 0.0
    %1319 = vmatpush2.msra.mxu0 0.0
    %1320 = vmatprep.subr.mxu0 0.0
    %1321 = vmatpush2.msra.mxu0 0.0
    %1322 = vmatprep.subr.mxu0 0.0
    %1323 = vmatpush2.msra.mxu0 0.0
    %1324 = vmatprep.subr.mxu0 0.0
    %1325 = vmatpush2.msra.mxu0 0.0
    %1326 = vmatprep.subr.mxu0 0.0
    %1327 = vmatpush2.msra.mxu0 0.0
    %1328 = vmatprep.subr.mxu0 0.0
    %1329 = vmatpush2.msra.mxu0 0.0
    %1330 = vmatprep.subr.mxu0 0.0
    %1331 = vmatpush2.msra.mxu0 0.0
    %1332 = vmatprep.subr.mxu0 0.0
    %1333 = vmatpush2.msra.mxu0 0.0
    %1334 = vmatprep.subr.mxu0 0.0
    %1335 = vmatpush2.msra.mxu0 0.0
    %1336 = vmatprep.subr.mxu0 0.0
    %1337 = vmatpush2.msra.mxu0 0.0
    %1338 = vmatprep.subr.mxu0 0.0
    %1339 = vmatpush2.msra.mxu0 0.0
    %1340 = vmatprep.subr.mxu0 0.0
    %1341 = vmatpush2.msra.mxu0 0.0
    %1342 = vmatprep.subr.mxu0 0.0
    %1343 = vmatpush2.msra.mxu0 0.0
    %1344 = vmatprep.mubr.f32.mxu0 0.0
    %1345 = vmatmul.mubr.f32.gmra.mxu0 %v1275
    %v1346 = vpop.f32.mrf.mxu0
    %v1347 = vadd.f32 0.0, %v1346
    %v1348 = vpop.f32.mrf.mxu0
    %1349 = vdwg.mxu0
    %v1350 = vadd.f32 %v1269, %v1347
    %v1351 = vld [vmem:[#allocation17] sm:$0x3]
    %v1352 = vld [vmem:[#allocation38] sm:$0xff]
    %v1353 = vld [vmem:[#allocation38 + $0x8] sm:$0xff]
    %v1354 = vld [vmem:[#allocation38 + $0x10] sm:$0xf]
    %v1356 = vsel %vm1111, %v1351, 0
    %v1359 = vsel %vm792, %v1354, 0
    %1361 = vmatprep.subr.mxu0 0.0
    %1362 = vmatpush1.msra.mxu0 0.0
    %1363 = vmatprep.subr.mxu0 0.0
    %1364 = vmatpush1.msra.mxu0 0.0
    %1365 = vmatprep.subr.mxu0 0.0
    %1366 = vmatpush1.msra.mxu0 0.0
    %1367 = vmatprep.subr.mxu0 0.0
    %1368 = vmatpush1.msra.mxu0 0.0
    %1369 = vmatprep.subr.mxu0 0.0
    %1370 = vmatpush1.msra.mxu0 0.0
    %1371 = vmatprep.subr.mxu0 0.0
    %1372 = vmatpush1.msra.mxu0 0.0
    %1373 = vmatprep.subr.mxu0 0.0
    %1374 = vmatpush1.msra.mxu0 0.0
    %1375 = vmatprep.subr.mxu0 0.0
    %1376 = vmatpush1.msra.mxu0 0.0
    %1377 = vmatprep.subr.mxu0 0.0
    %1378 = vmatpush1.msra.mxu0 0.0
    %1379 = vmatprep.subr.mxu0 0.0
    %1380 = vmatpush1.msra.mxu0 0.0
    %1381 = vmatprep.subr.mxu0 0.0
    %1382 = vmatpush1.msra.mxu0 0.0
    %1383 = vmatprep.subr.mxu0 0.0
    %1384 = vmatpush1.msra.mxu0 0.0
    %1385 = vmatprep.subr.mxu0 0.0
    %1386 = vmatpush1.msra.mxu0 0.0
    %1387 = vmatprep.subr.mxu0 0.0
    %1388 = vmatpush1.msra.mxu0 %v1359
    %1389 = vmatprep.subr.mxu0 0.0
    %1390 = vmatpush1.msra.mxu0 %v1353
    %1391 = vmatprep.subr.mxu0 0.0
    %1392 = vmatpush1.msra.mxu0 %v1352
    %1393 = vmatprep.subr.mxu0 0.0
    %1394 = vmatpush2.msra.mxu0 0.0
    %1395 = vmatprep.subr.mxu0 0.0
    %1396 = vmatpush2.msra.mxu0 0.0
    %1397 = vmatprep.subr.mxu0 0.0
    %1398 = vmatpush2.msra.mxu0 0.0
    %1399 = vmatprep.subr.mxu0 0.0
    %1400 = vmatpush2.msra.mxu0 0.0
    %1401 = vmatprep.subr.mxu0 0.0
    %1402 = vmatpush2.msra.mxu0 0.0
    %1403 = vmatprep.subr.mxu0 0.0
    %1404 = vmatpush2.msra.mxu0 0.0
    %1405 = vmatprep.subr.mxu0 0.0
    %1406 = vmatpush2.msra.mxu0 0.0
    %1407 = vmatprep.subr.mxu0 0.0
    %1408 = vmatpush2.msra.mxu0 0.0
    %1409 = vmatprep.subr.mxu0 0.0
    %1410 = vmatpush2.msra.mxu0 0.0
    %1411 = vmatprep.subr.mxu0 0.0
    %1412 = vmatpush2.msra.mxu0 0.0
    %1413 = vmatprep.subr.mxu0 0.0
    %1414 = vmatpush2.msra.mxu0 0.0
    %1415 = vmatprep.subr.mxu0 0.0
    %1416 = vmatpush2.msra.mxu0 0.0
    %1417 = vmatprep.subr.mxu0 0.0
    %1418 = vmatpush2.msra.mxu0 0.0
    %1419 = vmatprep.subr.mxu0 0.0
    %1420 = vmatpush2.msra.mxu0 0.0
    %1421 = vmatprep.subr.mxu0 0.0
    %1422 = vmatpush2.msra.mxu0 0.0
    %1423 = vmatprep.subr.mxu0 0.0
    %1424 = vmatpush2.msra.mxu0 0.0
    %1425 = vmatprep.mubr.f32.mxu0 0.0
    %1426 = vmatmul.mubr.f32.gmra.mxu0 %v1356
    %v1427 = vpop.f32.mrf.mxu0
    %v1428 = vadd.f32 0.0, %v1427
    %v1429 = vpop.f32.mrf.mxu0
    %1430 = vdwg.mxu0
    %v1431 = vadd.f32 %v1350, %v1428
    %v1432 = vld [vmem:[#allocation19] sm:$0x3]
    %v1433 = vld [vmem:[#allocation40] sm:$0xff]
    %v1434 = vld [vmem:[#allocation40 + $0x8] sm:$0xff]
    %v1435 = vld [vmem:[#allocation40 + $0x10] sm:$0xf]
    %v1437 = vsel %vm1111, %v1432, 0
    %v1440 = vsel %vm792, %v1435, 0
    %1442 = vmatprep.subr.mxu0 0.0
    %1443 = vmatpush1.msra.mxu0 0.0
    %1444 = vmatprep.subr.mxu0 0.0
    %1445 = vmatpush1.msra.mxu0 0.0
    %1446 = vmatprep.subr.mxu0 0.0
    %1447 = vmatpush1.msra.mxu0 0.0
    %1448 = vmatprep.subr.mxu0 0.0
    %1449 = vmatpush1.msra.mxu0 0.0
    %1450 = vmatprep.subr.mxu0 0.0
    %1451 = vmatpush1.msra.mxu0 0.0
    %1452 = vmatprep.subr.mxu0 0.0
    %1453 = vmatpush1.msra.mxu0 0.0
    %1454 = vmatprep.subr.mxu0 0.0
    %1455 = vmatpush1.msra.mxu0 0.0
    %1456 = vmatprep.subr.mxu0 0.0
    %1457 = vmatpush1.msra.mxu0 0.0
    %1458 = vmatprep.subr.mxu0 0.0
    %1459 = vmatpush1.msra.mxu0 0.0
    %1460 = vmatprep.subr.mxu0 0.0
    %1461 = vmatpush1.msra.mxu0 0.0
    %1462 = vmatprep.subr.mxu0 0.0
    %1463 = vmatpush1.msra.mxu0 0.0
    %1464 = vmatprep.subr.mxu0 0.0
    %1465 = vmatpush1.msra.mxu0 0.0
    %1466 = vmatprep.subr.mxu0 0.0
    %1467 = vmatpush1.msra.mxu0 0.0
    %1468 = vmatprep.subr.mxu0 0.0
    %1469 = vmatpush1.msra.mxu0 %v1440
    %1470 = vmatprep.subr.mxu0 0.0
    %1471 = vmatpush1.msra.mxu0 %v1434
    %1472 = vmatprep.subr.mxu0 0.0
    %1473 = vmatpush1.msra.mxu0 %v1433
    %1474 = vmatprep.subr.mxu0 0.0
    %1475 = vmatpush2.msra.mxu0 0.0
    %1476 = vmatprep.subr.mxu0 0.0
    %1477 = vmatpush2.msra.mxu0 0.0
    %1478 = vmatprep.subr.mxu0 0.0
    %1479 = vmatpush2.msra.mxu0 0.0
    %1480 = vmatprep.subr.mxu0 0.0
    %1481 = vmatpush2.msra.mxu0 0.0
    %1482 = vmatprep.subr.mxu0 0.0
    %1483 = vmatpush2.msra.mxu0 0.0
    %1484 = vmatprep.subr.mxu0 0.0
    %1485 = vmatpush2.msra.mxu0 0.0
    %1486 = vmatprep.subr.mxu0 0.0
    %1487 = vmatpush2.msra.mxu0 0.0
    %1488 = vmatprep.subr.mxu0 0.0
    %1489 = vmatpush2.msra.mxu0 0.0
    %1490 = vmatprep.subr.mxu0 0.0
    %1491 = vmatpush2.msra.mxu0 0.0
    %1492 = vmatprep.subr.mxu0 0.0
    %1493 = vmatpush2.msra.mxu0 0.0
    %1494 = vmatprep.subr.mxu0 0.0
    %1495 = vmatpush2.msra.mxu0 0.0
    %1496 = vmatprep.subr.mxu0 0.0
    %1497 = vmatpush2.msra.mxu0 0.0
    %1498 = vmatprep.subr.mxu0 0.0
    %1499 = vmatpush2.msra.mxu0 0.0
    %1500 = vmatprep.subr.mxu0 0.0
    %1501 = vmatpush2.msra.mxu0 0.0
    %1502 = vmatprep.subr.mxu0 0.0
    %1503 = vmatpush2.msra.mxu0 0.0
    %1504 = vmatprep.subr.mxu0 0.0
    %1505 = vmatpush2.msra.mxu0 0.0
    %1506 = vmatprep.mubr.f32.mxu0 0.0
    %1507 = vmatmul.mubr.f32.gmra.mxu0 %v1437
    %v1508 = vpop.f32.mrf.mxu0
    %v1509 = vadd.f32 0.0, %v1508
    %v1510 = vpop.f32.mrf.mxu0
    %1511 = vdwg.mxu0
    %v1512 = vadd.f32 %v1431, %v1509
    %v1513 = vld [vmem:[#allocation20] sm:$0x3]
    %v1514 = vld [vmem:[#allocation41] sm:$0xff]
    %v1515 = vld [vmem:[#allocation41 + $0x8] sm:$0xff]
    %v1516 = vld [vmem:[#allocation41 + $0x10] sm:$0xf]
    %v1518 = vsel %vm1111, %v1513, 0
    %v1521 = vsel %vm792, %v1516, 0
    %1523 = vmatprep.subr.mxu0 0.0
    %1524 = vmatpush1.msra.mxu0 0.0
    %1525 = vmatprep.subr.mxu0 0.0
    %1526 = vmatpush1.msra.mxu0 0.0
    %1527 = vmatprep.subr.mxu0 0.0
    %1528 = vmatpush1.msra.mxu0 0.0
    %1529 = vmatprep.subr.mxu0 0.0
    %1530 = vmatpush1.msra.mxu0 0.0
    %1531 = vmatprep.subr.mxu0 0.0
    %1532 = vmatpush1.msra.mxu0 0.0
    %1533 = vmatprep.subr.mxu0 0.0
    %1534 = vmatpush1.msra.mxu0 0.0
    %1535 = vmatprep.subr.mxu0 0.0
    %1536 = vmatpush1.msra.mxu0 0.0
    %1537 = vmatprep.subr.mxu0 0.0
    %1538 = vmatpush1.msra.mxu0 0.0
    %1539 = vmatprep.subr.mxu0 0.0
    %1540 = vmatpush1.msra.mxu0 0.0
    %1541 = vmatprep.subr.mxu0 0.0
    %1542 = vmatpush1.msra.mxu0 0.0
    %1543 = vmatprep.subr.mxu0 0.0
    %1544 = vmatpush1.msra.mxu0 0.0
    %1545 = vmatprep.subr.mxu0 0.0
    %1546 = vmatpush1.msra.mxu0 0.0
    %1547 = vmatprep.subr.mxu0 0.0
    %1548 = vmatpush1.msra.mxu0 0.0
    %1549 = vmatprep.subr.mxu0 0.0
    %1550 = vmatpush1.msra.mxu0 %v1521
    %1551 = vmatprep.subr.mxu0 0.0
    %1552 = vmatpush1.msra.mxu0 %v1515
    %1553 = vmatprep.subr.mxu0 0.0
    %1554 = vmatpush1.msra.mxu0 %v1514
    %1555 = vmatprep.subr.mxu0 0.0
    %1556 = vmatpush2.msra.mxu0 0.0
    %1557 = vmatprep.subr.mxu0 0.0
    %1558 = vmatpush2.msra.mxu0 0.0
    %1559 = vmatprep.subr.mxu0 0.0
    %1560 = vmatpush2.msra.mxu0 0.0
    %1561 = vmatprep.subr.mxu0 0.0
    %1562 = vmatpush2.msra.mxu0 0.0
    %1563 = vmatprep.subr.mxu0 0.0
    %1564 = vmatpush2.msra.mxu0 0.0
    %1565 = vmatprep.subr.mxu0 0.0
    %1566 = vmatpush2.msra.mxu0 0.0
    %1567 = vmatprep.subr.mxu0 0.0
    %1568 = vmatpush2.msra.mxu0 0.0
    %1569 = vmatprep.subr.mxu0 0.0
    %1570 = vmatpush2.msra.mxu0 0.0
    %1571 = vmatprep.subr.mxu0 0.0
    %1572 = vmatpush2.msra.mxu0 0.0
    %1573 = vmatprep.subr.mxu0 0.0
    %1574 = vmatpush2.msra.mxu0 0.0
    %1575 = vmatprep.subr.mxu0 0.0
    %1576 = vmatpush2.msra.mxu0 0.0
    %1577 = vmatprep.subr.mxu0 0.0
    %1578 = vmatpush2.msra.mxu0 0.0
    %1579 = vmatprep.subr.mxu0 0.0
    %1580 = vmatpush2.msra.mxu0 0.0
    %1581 = vmatprep.subr.mxu0 0.0
    %1582 = vmatpush2.msra.mxu0 0.0
    %1583 = vmatprep.subr.mxu0 0.0
    %1584 = vmatpush2.msra.mxu0 0.0
    %1585 = vmatprep.subr.mxu0 0.0
    %1586 = vmatpush2.msra.mxu0 0.0
    %1587 = vmatprep.mubr.f32.mxu0 0.0
    %1588 = vmatmul.mubr.f32.gmra.mxu0 %v1518
    %v1589 = vpop.f32.mrf.mxu0
    %v1590 = vadd.f32 0.0, %v1589
    %v1591 = vpop.f32.mrf.mxu0
    %1592 = vdwg.mxu0
    %v1593 = vadd.f32 %v1512, %v1590
    %v1594 = vld [vmem:[#allocation22] sm:$0x3]
    %v1595 = vld [vmem:[%s59] sm:$0xff]
    %v1596 = vld [vmem:[%s59 + $0x8] sm:$0xff]
    %v1597 = vld [vmem:[%s59 + $0x10] sm:$0xff]
    %v1598 = vld [vmem:[%s59 + $0x18] sm:$0xff]
    %vm1599 = vcmask 261120
    %v1601 = vsel %vm1599, %v1594, 0
    %1603 = vmatprep.subr.mxu0 0.0
    %1604 = vmatpush1.msra.mxu0 0.0
    %1605 = vmatprep.subr.mxu0 0.0
    %1606 = vmatpush1.msra.mxu0 0.0
    %1607 = vmatprep.subr.mxu0 0.0
    %1608 = vmatpush1.msra.mxu0 0.0
    %1609 = vmatprep.subr.mxu0 0.0
    %1610 = vmatpush1.msra.mxu0 0.0
    %1611 = vmatprep.subr.mxu0 0.0
    %1612 = vmatpush1.msra.mxu0 0.0
    %1613 = vmatprep.subr.mxu0 0.0
    %1614 = vmatpush1.msra.mxu0 0.0
    %1615 = vmatprep.subr.mxu0 0.0
    %1616 = vmatpush1.msra.mxu0 0.0
    %1617 = vmatprep.subr.mxu0 0.0
    %1618 = vmatpush1.msra.mxu0 0.0
    %1619 = vmatprep.subr.mxu0 0.0
    %1620 = vmatpush1.msra.mxu0 0.0
    %1621 = vmatprep.subr.mxu0 0.0
    %1622 = vmatpush1.msra.mxu0 0.0
    %1623 = vmatprep.subr.mxu0 0.0
    %1624 = vmatpush1.msra.mxu0 0.0
    %1625 = vmatprep.subr.mxu0 0.0
    %1626 = vmatpush1.msra.mxu0 0.0
    %1627 = vmatprep.subr.mxu0 0.0
    %1628 = vmatpush1.msra.mxu0 %v1598
    %1629 = vmatprep.subr.mxu0 0.0
    %1630 = vmatpush1.msra.mxu0 %v1597
    %1631 = vmatprep.subr.mxu0 0.0
    %1632 = vmatpush1.msra.mxu0 %v1596
    %1633 = vmatprep.subr.mxu0 0.0
    %1634 = vmatpush1.msra.mxu0 %v1595
    %1635 = vmatprep.subr.mxu0 0.0
    %1636 = vmatpush2.msra.mxu0 0.0
    %1637 = vmatprep.subr.mxu0 0.0
    %1638 = vmatpush2.msra.mxu0 0.0
    %1639 = vmatprep.subr.mxu0 0.0
    %1640 = vmatpush2.msra.mxu0 0.0
    %1641 = vmatprep.subr.mxu0 0.0
    %1642 = vmatpush2.msra.mxu0 0.0
    %1643 = vmatprep.subr.mxu0 0.0
    %1644 = vmatpush2.msra.mxu0 0.0
    %1645 = vmatprep.subr.mxu0 0.0
    %1646 = vmatpush2.msra.mxu0 0.0
    %1647 = vmatprep.subr.mxu0 0.0
    %1648 = vmatpush2.msra.mxu0 0.0
    %1649 = vmatprep.subr.mxu0 0.0
    %1650 = vmatpush2.msra.mxu0 0.0
    %1651 = vmatprep.subr.mxu0 0.0
    %1652 = vmatpush2.msra.mxu0 0.0
    %1653 = vmatprep.subr.mxu0 0.0
    %1654 = vmatpush2.msra.mxu0 0.0
    %1655 = vmatprep.subr.mxu0 0.0
    %1656 = vmatpush2.msra.mxu0 0.0
    %1657 = vmatprep.subr.mxu0 0.0
    %1658 = vmatpush2.msra.mxu0 0.0
    %1659 = vmatprep.subr.mxu0 0.0
    %1660 = vmatpush2.msra.mxu0 0.0
    %1661 = vmatprep.subr.mxu0 0.0
    %1662 = vmatpush2.msra.mxu0 0.0
    %1663 = vmatprep.subr.mxu0 0.0
    %1664 = vmatpush2.msra.mxu0 0.0
    %1665 = vmatprep.subr.mxu0 0.0
    %1666 = vmatpush2.msra.mxu0 0.0
    %1667 = vmatprep.mubr.f32.mxu0 0.0
    %1668 = vmatmul.mubr.f32.gmra.mxu0 %v1601
    %v1669 = vpop.f32.mrf.mxu0
    %v1670 = vadd.f32 0.0, %v1669
    %v1671 = vpop.f32.mrf.mxu0
    %1672 = vdwg.mxu0
    %v1673 = vadd.f32 %v1593, %v1670
    %v1674 = vld [vmem:[%s61] sm:$0x1]
    %v1676 = vlaneseq
    %v1677 = vshrl.u32 %v1676, 7
    %v1678 = vsub.s32 0, %v1677
    %v1679 = vrot.slane %v1674, %v1678
    %v1681 = vadd.f32 %v1673, %v1679
    %v1682 = vmax.f32 %v1681, 0.0
    %v1683 = vlaneseq
    %v1684 = vand.u32 %v1683, 127
    %vm1685 = vcmp.lt.s32.totalorder %v1684, 14
    %v1686 = vsel %vm1685, %v1682, 0.0
    %v1687 = vld [vmem:[#allocation43] sm:$0xff]
    %v1688 = vld [vmem:[#allocation43 + $0x8] sm:$0xff]
    %v1689 = vld [vmem:[#allocation43 + $0x10] sm:$0xff]
    %v1690 = vld [vmem:[#allocation43 + $0x18] sm:$0xff]
    %v1691 = vld [vmem:[#allocation43 + $0x20] sm:$0xff]
    %v1692 = vld [vmem:[#allocation43 + $0x28] sm:$0xff]
    %v1693 = vld [vmem:[#allocation43 + $0x30] sm:$0xff]
    %v1694 = vld [vmem:[#allocation43 + $0x38] sm:$0xff]
    %v1695 = vld [vmem:[#allocation43 + $0x40] sm:$0xff]
    %v1696 = vld [vmem:[#allocation43 + $0x48] sm:$0xff]
    %v1697 = vld [vmem:[#allocation43 + $0x50] sm:$0xff]
    %v1698 = vld [vmem:[#allocation43 + $0x58] sm:$0xff]
    %v1699 = vld [vmem:[#allocation43 + $0x60] sm:$0xff]
    %v1700 = vld [vmem:[#allocation43 + $0x68] sm:$0xff]
    %v1701 = vld [vmem:[#allocation43 + $0x70] sm:$0xff]
    %v1702 = vld [vmem:[#allocation43 + $0x78] sm:$0xff]
    %1703 = vmatprep.subr.mxu0 0.0
    %1704 = vmatpush1.msra.mxu0 %v1702
    %1705 = vmatprep.subr.mxu0 0.0
    %1706 = vmatpush1.msra.mxu0 %v1701
    %1707 = vmatprep.subr.mxu0 0.0
    %1708 = vmatpush1.msra.mxu0 %v1700
    %1709 = vmatprep.subr.mxu0 0.0
    %1710 = vmatpush1.msra.mxu0 %v1699
    %1711 = vmatprep.subr.mxu0 0.0
    %1712 = vmatpush1.msra.mxu0 %v1698
    %1713 = vmatprep.subr.mxu0 0.0
    %1714 = vmatpush1.msra.mxu0 %v1697
    %1715 = vmatprep.subr.mxu0 0.0
    %1716 = vmatpush1.msra.mxu0 %v1696
    %1717 = vmatprep.subr.mxu0 0.0
    %1718 = vmatpush1.msra.mxu0 %v1695
    %1719 = vmatprep.subr.mxu0 0.0
    %1720 = vmatpush1.msra.mxu0 %v1694
    %1721 = vmatprep.subr.mxu0 0.0
    %1722 = vmatpush1.msra.mxu0 %v1693
    %1723 = vmatprep.subr.mxu0 0.0
    %1724 = vmatpush1.msra.mxu0 %v1692
    %1725 = vmatprep.subr.mxu0 0.0
    %1726 = vmatpush1.msra.mxu0 %v1691
    %1727 = vmatprep.subr.mxu0 0.0
    %1728 = vmatpush1.msra.mxu0 %v1690
    %1729 = vmatprep.subr.mxu0 0.0
    %1730 = vmatpush1.msra.mxu0 %v1689
    %1731 = vmatprep.subr.mxu0 0.0
    %1732 = vmatpush1.msra.mxu0 %v1688
    %1733 = vmatprep.subr.mxu0 0.0
    %1734 = vmatpush1.msra.mxu0 %v1687
    %1735 = vmatprep.subr.mxu0 0.0
    %1736 = vmatpush2.msra.mxu0 0.0
    %1737 = vmatprep.subr.mxu0 0.0
    %1738 = vmatpush2.msra.mxu0 0.0
    %1739 = vmatprep.subr.mxu0 0.0
    %1740 = vmatpush2.msra.mxu0 0.0
    %1741 = vmatprep.subr.mxu0 0.0
    %1742 = vmatpush2.msra.mxu0 0.0
    %1743 = vmatprep.subr.mxu0 0.0
    %1744 = vmatpush2.msra.mxu0 0.0
    %1745 = vmatprep.subr.mxu0 0.0
    %1746 = vmatpush2.msra.mxu0 0.0
    %1747 = vmatprep.subr.mxu0 0.0
    %1748 = vmatpush2.msra.mxu0 0.0
    %1749 = vmatprep.subr.mxu0 0.0
    %1750 = vmatpush2.msra.mxu0 0.0
    %1751 = vmatprep.subr.mxu0 0.0
    %1752 = vmatpush2.msra.mxu0 0.0
    %1753 = vmatprep.subr.mxu0 0.0
    %1754 = vmatpush2.msra.mxu0 0.0
    %1755 = vmatprep.subr.mxu0 0.0
    %1756 = vmatpush2.msra.mxu0 0.0
    %1757 = vmatprep.subr.mxu0 0.0
    %1758 = vmatpush2.msra.mxu0 0.0
    %1759 = vmatprep.subr.mxu0 0.0
    %1760 = vmatpush2.msra.mxu0 0.0
    %1761 = vmatprep.subr.mxu0 0.0
    %1762 = vmatpush2.msra.mxu0 0.0
    %1763 = vmatprep.subr.mxu0 0.0
    %1764 = vmatpush2.msra.mxu0 0.0
    %1765 = vmatprep.subr.mxu0 0.0
    %1766 = vmatpush2.msra.mxu0 0.0
    %1767 = vmatprep.mubr.f32.mxu0 0.0
    %1768 = vmatmul.mubr.f32.gmra.mxu0 %v1682
    %v1769 = vpop.f32.mrf.mxu0
    %v1770 = vadd.f32 0.0, %v1769
    %v1771 = vpop.f32.mrf.mxu0
    %1772 = vdwg.mxu0
    %v1773 = vadd.f32 %v1686, %v1770
    %v1774 = vld [vmem:[%s65] sm:$0x1]
    %v1776 = vlaneseq
    %v1777 = vshrl.u32 %v1776, 7
    %v1778 = vsub.s32 0, %v1777
    %v1779 = vrot.slane %v1774, %v1778
    %v1781 = vadd.f32 %v1773, %v1779
    %1782 = vst [vmem:[#allocation44] sm:$0x3] %v1781
    // Predicated region
    $region242: #{tpu_custom_call.1} parent=1 // pred_check
      _
    $region243: #{tpu_custom_call.1} parent=1 // pred_check_branch
      %1784 = sbr.rel (0) target = $region245
    $region244: #{tpu_custom_call.1} parent=1 // pred_region
      %s1786 = ssub.s32 32, 32
      %1787 = vsyncadd [#allocation4], %s1786
      %s1789 = sshll.u32 [#allocation44], 4
      %s1790 = int_to_ptr.vmem [resolvable:$true] %s1789
      %1792 = dma.vmem_to_hbm [thread:$0]  %s1790, 32, %s67, [#allocation4]
    $region245: #{tpu_custom_call.1} parent=1 // pred_fallthru
      _
    // Predicated region
    $region246: #{tpu_custom_call.1} parent=1 // pred_check
      _
    $region247: #{tpu_custom_call.1} parent=1 // pred_check_branch
      %1794 = sbr.rel (0) target = $region249
    $region248: #{tpu_custom_call.1} parent=1 // pred_region
      %1795 = dma.done [#allocation4], 32
    $region249: #{tpu_custom_call.1} parent=1 // pred_fallthru
      _
    %1796 = vsyncpa [#allocation3], 1
    %1797 = vsyncpa [#allocation6], 1
    %1798 = vsyncpa [#allocation9], 1
    %1799 = vsyncpa [#allocation12], 1
    %1800 = vsyncpa [#allocation15], 1
    %1801 = vsyncpa [#allocation18], 1
    %1802 = vsyncpa [#allocation21], 1
    %1803 = vsyncpa [#allocation24], 1
    %1804 = vsyncpa [#allocation27], 1
    %1805 = vsyncpa [#allocation30], 1
    %1806 = vsyncpa [#allocation33], 1
    %1807 = vsyncpa [#allocation36], 1
    %1808 = vsyncpa [#allocation39], 1
    %1809 = vsyncpa [#allocation42], 1
    %1810 = vsyncpa [#allocation4], 1

</llo_original>
